<compile_context>
chip_gen: v6e
topology: v6e:2x2x1
jax: 0.10.0
libtpu: 0.0.40
codegen_flags: <defaults>
</compile_context>

<pallas_src>
import jax
import jax.numpy as jnp
from jax.experimental import pallas as pl
from jax.experimental.pallas import tpu as pltpu

LEAKY_SLOPE = 0.01  # nn.LeakyReLU default negative_slope

# Pair-tile caps (multiples of 8 / 128 so partial-N cases still satisfy tiling rules).
_TI_CAP = 128
_TJ_CAP = 128


def _leaky(x):
    # mul + max instead of cmp + select (less VPU slot pressure).
    return jnp.maximum(x, LEAKY_SLOPE * x)


# -----------------------------------------------------------------------------
# Kernel A: EdgeNet similarity MLP over a (TI x TJ) tile of node pairs.
#   fi [TI, F] bf16, fj [TJ, F] bf16            (row blocks i and j of node_feat)
#   w0 [F, 2EF] bf16, s0/b0 [1, 2EF] f32        (conv0 + folded norm0)
#   w1 [2EF, EF] bf16, s1/b1 [1, EF] f32        (conv1 + folded norm1)
#   w2 [1, EF] f32, b2 [1, 1] f32               (conv_out with bias, as a row)
#   sim_ref [TI, TJ] f32                        (lane-dense block of sim[N, N])
# -----------------------------------------------------------------------------
def edge_sim_kernel(fi_ref, fj_ref, w0_ref, s0_ref, b0_ref,
                    w1_ref, s1_ref, b1_ref, w2_ref, b2_ref, sim_ref):
    TI, F = fi_ref.shape
    TJ = fj_ref.shape[0]
    EF = w1_ref.shape[1]

    fi = fi_ref[...]                                                     # [TI, F] bf16
    fj = fj_ref[...]                                                     # [TJ, F] bf16
    # Pairwise |f_i - f_j| for this tile, flattened to pair-rows for the MXU.
    x = jnp.abs(fi[:, None, :] - fj[None, :, :]).reshape(TI * TJ, F)     # [TP, F] bf16

    h = jnp.dot(x, w0_ref[...], preferred_element_type=jnp.float32)      # [TP, 2EF] f32
    h = _leaky(h * s0_ref[...] + b0_ref[...])                            # BN(eval)+LeakyReLU
    h = jnp.dot(h.astype(jnp.bfloat16), w1_ref[...],
                preferred_element_type=jnp.float32)                      # [TP, EF] f32
    h = _leaky(h * s1_ref[...] + b1_ref[...])

    # 1-channel conv_out as a VPU reduction (avoids [EF,1] MXU matmul and a
    # lane-width-1 store); result written lane-dense as a [TI, TJ] block.
    h3 = h.reshape(TI, TJ, EF)
    score = jnp.sum(h3 * w2_ref[...][None], axis=-1)                     # [TI, TJ]
    sim_ref[...] = jax.nn.sigmoid(score + b2_ref[...])


# -----------------------------------------------------------------------------
# Kernel B: EdgeNet tail (mask + normalization) + NodeNet, single block.
#   sim [N, N], lab_i [N, 1] int32, lab_j [1, N] int32, feat [N, F]
#   w0a/w0b [F, 2C] (split of conv0 over [feat | aggr]), s0/b0 [1, 2C]
#   w1 [2C, C], s1/b1 [1, C]
#   logits [N, C]
# -----------------------------------------------------------------------------
def node_net_kernel(sim_ref, lab_i_ref, lab_j_ref, feat_ref,
                    w0a_ref, w0b_ref, s0_ref, b0_ref, w1_ref, s1_ref, b1_ref,
                    logits_ref):
    N = sim_ref.shape[0]
    sim = sim_ref[...]
    eye = (jax.lax.broadcasted_iota(jnp.int32, (N, N), 0)
           == jax.lax.broadcasted_iota(jnp.int32, (N, N), 1)).astype(jnp.float32)
    # Label-equality mask computed in-kernel (no N x N mask traffic from HBM).
    mask = (lab_i_ref[...] == lab_j_ref[...]).astype(jnp.float32)        # [N, N]

    # EdgeNet tail: edge = mask*sim + I + 1e-6, column-normalized
    # (torch.sum(edge_feat, dim=1) on [1,N,N] -> per-column sums).
    edge = mask * sim + eye + 1e-6
    colsum = jnp.sum(edge, axis=0, keepdims=True)                        # [1, N]
    edge = edge / colsum

    # NodeNet: zero diagonal + L1 row normalization (F.normalize p=1, dim=-1).
    e2 = edge * (1.0 - eye)
    rowsum = jnp.sum(jnp.abs(e2), axis=1, keepdims=True)                 # [N, 1]
    e2 = e2 / jnp.maximum(rowsum, 1e-12)

    feat = feat_ref[...]                                                 # [N, F]
    aggr = jnp.dot(e2, feat, preferred_element_type=jnp.float32)         # [N, F]

    # conv0 over cat([feat, aggr]) without a lane-concat: two matmuls, one acc.
    h = (jnp.dot(feat, w0a_ref[...], preferred_element_type=jnp.float32)
         + jnp.dot(aggr, w0b_ref[...], preferred_element_type=jnp.float32))
    h = _leaky(h * s0_ref[...] + b0_ref[...])
    out = jnp.dot(h, w1_ref[...], preferred_element_type=jnp.float32)    # [N, C]
    logits_ref[...] = out * s1_ref[...] + b1_ref[...]                    # no relu on last layer


# -----------------------------------------------------------------------------
# Wrappers / glue
# -----------------------------------------------------------------------------
def _fold_bn(gamma, beta, mean, var, eps=1e-5):
    s = gamma / jnp.sqrt(var + eps)
    b = beta - mean * s
    return s[None, :], b[None, :]


def init_params(key, in_features, edge_features, nclasses):
    F, EF, C = in_features, edge_features, nclasses
    ks = jax.random.split(key, 20)
    p = {}
    # EdgeNet sim_network (1x1 convs -> [C_in, C_out] matrices)
    p["w0e"] = 0.1 * jax.random.normal(ks[0], (F, 2 * EF), jnp.float32)
    p["w1e"] = 0.1 * jax.random.normal(ks[1], (2 * EF, EF), jnp.float32)
    p["w2e"] = 0.1 * jax.random.normal(ks[2], (EF, 1), jnp.float32)
    p["b2e"] = 0.1 * jax.random.normal(ks[3], (1, 1), jnp.float32)
    p["s0e"], p["b0e"] = _fold_bn(
        jax.random.uniform(ks[4], (2 * EF,), minval=0.5, maxval=1.5),
        0.1 * jax.random.normal(ks[5], (2 * EF,)),
        0.1 * jax.random.normal(ks[6], (2 * EF,)),
        jax.random.uniform(ks[7], (2 * EF,), minval=0.5, maxval=1.5))
    p["s1e"], p["b1e"] = _fold_bn(
        jax.random.uniform(ks[8], (EF,), minval=0.5, maxval=1.5),
        0.1 * jax.random.normal(ks[9], (EF,)),
        0.1 * jax.random.normal(ks[10], (EF,)),
        jax.random.uniform(ks[11], (EF,), minval=0.5, maxval=1.5))
    # NodeNet network
    p["w0n"] = 0.1 * jax.random.normal(ks[12], (2 * F, 2 * C), jnp.float32)
    p["w1n"] = 0.1 * jax.random.normal(ks[13], (2 * C, C), jnp.float32)
    p["s0n"], p["b0n"] = _fold_bn(
        jax.random.uniform(ks[14], (2 * C,), minval=0.5, maxval=1.5),
        0.1 * jax.random.normal(ks[15], (2 * C,)),
        0.1 * jax.random.normal(ks[16], (2 * C,)),
        jax.random.uniform(ks[17], (2 * C,), minval=0.5, maxval=1.5))
    p["s1n"], p["b1n"] = _fold_bn(
        jax.random.uniform(ks[18], (C,), minval=0.5, maxval=1.5),
        0.1 * jax.random.normal(ks[19], (C,)),
        jnp.zeros((C,), jnp.float32),
        jnp.ones((C,), jnp.float32))
    return p


def classifier_gnn_forward(node_feat, node_label, p):
    """node_feat: [N, F] float32, node_label: [N, 1] int32 -> (logits [N, C], sim [N, N])."""
    N, F = node_feat.shape
    C = p["w1n"].shape[1]

    # ---- Edge-similarity kernel: 2-D pair-tile grid -------------------------
    TI = N if N <= _TI_CAP else _TI_CAP
    TJ = N if N <= _TJ_CAP else _TJ_CAP
    grid = (pl.cdiv(N, TI), pl.cdiv(N, TJ))

    feat16 = node_feat.astype(jnp.bfloat16)
    w0e = p["w0e"].astype(jnp.bfloat16)
    w1e = p["w1e"].astype(jnp.bfloat16)
    w2e_row = p["w2e"].T                                    # [1, EF] f32

    def _const(shape):
        return pl.BlockSpec(shape, lambda i, j: (0,) * len(shape))

    edge_consts = (w0e, p["s0e"], p["b0e"], w1e, p["s1e"], p["b1e"], w2e_row, p["b2e"])
    sim = pl.pallas_call(
        edge_sim_kernel,
        out_shape=jax.ShapeDtypeStruct((N, N), jnp.float32),
        grid=grid,
        in_specs=[pl.BlockSpec((TI, F), lambda i, j: (i, 0)),   # f_i rows
                  pl.BlockSpec((TJ, F), lambda i, j: (j, 0))]   # f_j rows
                 + [_const(a.shape) for a in edge_consts],      # resident weights
        out_specs=pl.BlockSpec((TI, TJ), lambda i, j: (i, j)),
        compiler_params=pltpu.CompilerParams(
            dimension_semantics=("parallel", "parallel")),
    )(feat16, feat16, *edge_consts)

    # ---- Node kernel: single block (tiny relative to the edge MLP) ----------
    lab_i = node_label.astype(jnp.int32)                    # [N, 1]
    lab_j = lab_i.reshape(1, N)                             # [1, N]
    w0na, w0nb = p["w0n"][:F], p["w0n"][F:]                 # split of cat([feat, aggr])

    def _full(shape):
        return pl.BlockSpec(shape, lambda i: (0,) * len(shape))

    node_args = (sim, lab_i, lab_j, node_feat, w0na, w0nb,
                 p["s0n"], p["b0n"], p["w1n"], p["s1n"], p["b1n"])
    logits = pl.pallas_call(
        node_net_kernel,
        out_shape=jax.ShapeDtypeStruct((N, C), jnp.float32),
        grid=(1,),
        in_specs=[_full(a.shape) for a in node_args],
        out_specs=_full((N, C)),
        compiler_params=pltpu.CompilerParams(dimension_semantics=("arbitrary",)),
    )(*node_args)

    return logits, sim


if __name__ == "__main__":
    N, IN_FEATURES, EDGE_FEATURES, NCLASSES = 8, 32, 32, 4
    key = jax.random.PRNGKey(0)
    k_feat, k_lab, k_par = jax.random.split(key, 3)

    init_node_feat = jax.random.normal(k_feat, (N, IN_FEATURES), jnp.float32)
    init_node_label = jax.random.randint(k_lab, (N, 1), 0, NCLASSES, jnp.int32)
    params = init_params(k_par, IN_FEATURES, EDGE_FEATURES, NCLASSES)

    forward = jax.jit(classifier_gnn_forward)
    logits_gnn, edge_sim = forward(init_node_feat, init_node_label, params)
    jax.block_until_ready((logits_gnn, edge_sim))

    assert logits_gnn.shape == (N, NCLASSES)
    assert edge_sim.shape == (N, N)
    assert bool(jnp.all(jnp.isfinite(logits_gnn))) and bool(jnp.all(jnp.isfinite(edge_sim)))
    assert bool(jnp.all((edge_sim > 0.0) & (edge_sim < 1.0)))
    print("KERNEL_OK")
</pallas_src>

<mosaic_0001>
module attributes {stable_mosaic.version = 11 : i64} {
  func.func @edge_sim_kernel(%arg0: i32, %arg1: i32, %arg2: memref<8x32xbf16, #tpu.memory_space<vmem>>, %arg3: memref<8x32xbf16, #tpu.memory_space<vmem>>, %arg4: memref<32x64xbf16, #tpu.memory_space<vmem>>, %arg5: memref<1x64xf32, #tpu.memory_space<vmem>>, %arg6: memref<1x64xf32, #tpu.memory_space<vmem>>, %arg7: memref<64x32xbf16, #tpu.memory_space<vmem>>, %arg8: memref<1x32xf32, #tpu.memory_space<vmem>>, %arg9: memref<1x32xf32, #tpu.memory_space<vmem>>, %arg10: memref<1x32xf32, #tpu.memory_space<vmem>>, %arg11: memref<1x1xf32, #tpu.memory_space<vmem>>, %arg12: memref<8x8xf32, #tpu.memory_space<vmem>>) attributes {dimension_semantics = [#tpu.dimension_semantics<parallel>, #tpu.dimension_semantics<parallel>], iteration_bounds = array<i64: 1, 1>, scalar_prefetch = 0 : i64, scratch_operands = 0 : i64, tpu.core_type = #tpu.core_type<tc>, window_params = [{transform_indices = @transform_0, window_bounds = array<i64: 8, 32>}, {transform_indices = @transform_1, window_bounds = array<i64: 8, 32>}, {pipeline_mode = #tpu.pipeline_mode<synchronous>, transform_indices = @transform_2, window_bounds = array<i64: 32, 64>}, {pipeline_mode = #tpu.pipeline_mode<synchronous>, transform_indices = @transform_3, window_bounds = array<i64: 1, 64>}, {pipeline_mode = #tpu.pipeline_mode<synchronous>, transform_indices = @transform_4, window_bounds = array<i64: 1, 64>}, {pipeline_mode = #tpu.pipeline_mode<synchronous>, transform_indices = @transform_5, window_bounds = array<i64: 64, 32>}, {pipeline_mode = #tpu.pipeline_mode<synchronous>, transform_indices = @transform_6, window_bounds = array<i64: 1, 32>}, {pipeline_mode = #tpu.pipeline_mode<synchronous>, transform_indices = @transform_7, window_bounds = array<i64: 1, 32>}, {pipeline_mode = #tpu.pipeline_mode<synchronous>, transform_indices = @transform_8, window_bounds = array<i64: 1, 32>}, {pipeline_mode = #tpu.pipeline_mode<synchronous>, transform_indices = @transform_9, window_bounds = array<i64: 1, 1>}, {transform_indices = @transform_10, window_bounds = array<i64: 8, 8>}]} {
    %c0 = arith.constant 0 : index
    %c0_0 = arith.constant 0 : index
    %0 = vector.load %arg2[%c0, %c0_0] : memref<8x32xbf16, #tpu.memory_space<vmem>>, vector<8x32xbf16>
    %c0_1 = arith.constant 0 : index
    %c0_2 = arith.constant 0 : index
    %1 = vector.load %arg3[%c0_1, %c0_2] : memref<8x32xbf16, #tpu.memory_space<vmem>>, vector<8x32xbf16>
    %2 = vector.shape_cast %0 : vector<8x32xbf16> to vector<8x1x32xbf16>
    %3 = vector.shape_cast %1 : vector<8x32xbf16> to vector<1x8x32xbf16>
    %4 = vector.broadcast %2 : vector<8x1x32xbf16> to vector<8x8x32xbf16>
    %5 = vector.broadcast %3 : vector<1x8x32xbf16> to vector<8x8x32xbf16>
    %6 = arith.subf %4, %5 : vector<8x8x32xbf16>
    %7 = math.absf %6 : vector<8x8x32xbf16>
    %8 = vector.shape_cast %7 : vector<8x8x32xbf16> to vector<64x32xbf16>
    %c0_3 = arith.constant 0 : index
    %c0_4 = arith.constant 0 : index
    %9 = vector.load %arg4[%c0_3, %c0_4] : memref<32x64xbf16, #tpu.memory_space<vmem>>, vector<32x64xbf16>
    %cst = arith.constant dense<0.000000e+00> : vector<64x64xf32>
    %10 = tpu.matmul %8, %9, %cst {dimension_numbers = #tpu.dot_dimension_numbers<[1], [0], [0], [1], [0, 0, 1, 1], [], []>} : vector<64x32xbf16>, vector<32x64xbf16>, vector<64x64xf32> -> vector<64x64xf32>
    %c0_5 = arith.constant 0 : index
    %c0_6 = arith.constant 0 : index
    %11 = vector.load %arg5[%c0_5, %c0_6] : memref<1x64xf32, #tpu.memory_space<vmem>>, vector<1x64xf32>
    %12 = vector.broadcast %11 : vector<1x64xf32> to vector<64x64xf32>
    %13 = arith.mulf %10, %12 : vector<64x64xf32>
    %c0_7 = arith.constant 0 : index
    %c0_8 = arith.constant 0 : index
    %14 = vector.load %arg6[%c0_7, %c0_8] : memref<1x64xf32, #tpu.memory_space<vmem>>, vector<1x64xf32>
    %15 = vector.broadcast %14 : vector<1x64xf32> to vector<64x64xf32>
    %16 = arith.addf %13, %15 : vector<64x64xf32>
    %cst_9 = arith.constant 0.00999999977 : f32
    %17 = vector.broadcast %cst_9 : f32 to vector<64x64xf32>
    %18 = arith.mulf %17, %16 : vector<64x64xf32>
    %19 = arith.maximumf %16, %18 : vector<64x64xf32>
    %20 = arith.truncf %19 : vector<64x64xf32> to vector<64x64xbf16>
    %c0_10 = arith.constant 0 : index
    %c0_11 = arith.constant 0 : index
    %21 = vector.load %arg7[%c0_10, %c0_11] : memref<64x32xbf16, #tpu.memory_space<vmem>>, vector<64x32xbf16>
    %cst_12 = arith.constant dense<0.000000e+00> : vector<64x32xf32>
    %22 = tpu.matmul %20, %21, %cst_12 {dimension_numbers = #tpu.dot_dimension_numbers<[1], [0], [0], [1], [0, 0, 1, 1], [], []>} : vector<64x64xbf16>, vector<64x32xbf16>, vector<64x32xf32> -> vector<64x32xf32>
    %c0_13 = arith.constant 0 : index
    %c0_14 = arith.constant 0 : index
    %23 = vector.load %arg8[%c0_13, %c0_14] : memref<1x32xf32, #tpu.memory_space<vmem>>, vector<1x32xf32>
    %24 = vector.broadcast %23 : vector<1x32xf32> to vector<64x32xf32>
    %25 = arith.mulf %22, %24 : vector<64x32xf32>
    %c0_15 = arith.constant 0 : index
    %c0_16 = arith.constant 0 : index
    %26 = vector.load %arg9[%c0_15, %c0_16] : memref<1x32xf32, #tpu.memory_space<vmem>>, vector<1x32xf32>
    %27 = vector.broadcast %26 : vector<1x32xf32> to vector<64x32xf32>
    %28 = arith.addf %25, %27 : vector<64x32xf32>
    %cst_17 = arith.constant 0.00999999977 : f32
    %29 = vector.broadcast %cst_17 : f32 to vector<64x32xf32>
    %30 = arith.mulf %29, %28 : vector<64x32xf32>
    %31 = arith.maximumf %28, %30 : vector<64x32xf32>
    %32 = vector.shape_cast %31 : vector<64x32xf32> to vector<8x8x32xf32>
    %c0_18 = arith.constant 0 : index
    %c0_19 = arith.constant 0 : index
    %33 = vector.load %arg10[%c0_18, %c0_19] : memref<1x32xf32, #tpu.memory_space<vmem>>, vector<1x32xf32>
    %34 = vector.shape_cast %33 : vector<1x32xf32> to vector<1x1x32xf32>
    %35 = vector.broadcast %34 : vector<1x1x32xf32> to vector<8x8x32xf32>
    %36 = arith.mulf %32, %35 : vector<8x8x32xf32>
    %cst_20 = arith.constant dense<0.000000e+00> : vector<8x8xf32>
    %37 = vector.multi_reduction <add>, %36, %cst_20 [2] : vector<8x8x32xf32> to vector<8x8xf32>
    %c0_21 = arith.constant 0 : index
    %c0_22 = arith.constant 0 : index
    %38 = vector.load %arg11[%c0_21, %c0_22] : memref<1x1xf32, #tpu.memory_space<vmem>>, vector<1x1xf32>
    %39 = vector.broadcast %38 : vector<1x1xf32> to vector<8x8xf32>
    %40 = arith.addf %37, %39 : vector<8x8xf32>
    %41 = arith.negf %40 : vector<8x8xf32>
    %42 = math.exp %41 : vector<8x8xf32>
    %cst_23 = arith.constant 1.000000e+00 : f32
    %43 = vector.broadcast %cst_23 : f32 to vector<8x8xf32>
    %44 = arith.addf %43, %42 : vector<8x8xf32>
    %45 = arith.divf %43, %44 : vector<8x8xf32>
    %c0_24 = arith.constant 0 : index
    %c0_25 = arith.constant 0 : index
    %46 = vector.load %arg12[%c0_24, %c0_25] : memref<8x8xf32, #tpu.memory_space<vmem>>, vector<8x8xf32>
    tpu.vector_store %arg12[%c0_24, %c0_25], %45 {strides = array<i32>} : memref<8x8xf32, #tpu.memory_space<vmem>>, vector<8x8xf32>,
    return
  }
  func.func @transform_0(%arg0: i32, %arg1: i32) -> (i32, i32) {
    %c0_i32 = arith.constant 0 : i32
    %c0_i32_0 = arith.constant 0 : i32
    return %arg0, %c0_i32 : i32, i32
  }
  func.func @transform_1(%arg0: i32, %arg1: i32) -> (i32, i32) {
    %c0_i32 = arith.constant 0 : i32
    %c0_i32_0 = arith.constant 0 : i32
    return %arg1, %c0_i32 : i32, i32
  }
  func.func @transform_2(%arg0: i32, %arg1: i32) -> (i32, i32) {
    %c0_i32 = arith.constant 0 : i32
    %c0_i32_0 = arith.constant 0 : i32
    %c0_i32_1 = arith.constant 0 : i32
    return %c0_i32, %c0_i32_0 : i32, i32
  }
  func.func @transform_3(%arg0: i32, %arg1: i32) -> (i32, i32) {
    %c0_i32 = arith.constant 0 : i32
    %c0_i32_0 = arith.constant 0 : i32
    %c0_i32_1 = arith.constant 0 : i32
    return %c0_i32, %c0_i32_0 : i32, i32
  }
  func.func @transform_4(%arg0: i32, %arg1: i32) -> (i32, i32) {
    %c0_i32 = arith.constant 0 : i32
    %c0_i32_0 = arith.constant 0 : i32
    %c0_i32_1 = arith.constant 0 : i32
    return %c0_i32, %c0_i32_0 : i32, i32
  }
  func.func @transform_5(%arg0: i32, %arg1: i32) -> (i32, i32) {
    %c0_i32 = arith.constant 0 : i32
    %c0_i32_0 = arith.constant 0 : i32
    %c0_i32_1 = arith.constant 0 : i32
    return %c0_i32, %c0_i32_0 : i32, i32
  }
  func.func @transform_6(%arg0: i32, %arg1: i32) -> (i32, i32) {
    %c0_i32 = arith.constant 0 : i32
    %c0_i32_0 = arith.constant 0 : i32
    %c0_i32_1 = arith.constant 0 : i32
    return %c0_i32, %c0_i32_0 : i32, i32
  }
  func.func @transform_7(%arg0: i32, %arg1: i32) -> (i32, i32) {
    %c0_i32 = arith.constant 0 : i32
    %c0_i32_0 = arith.constant 0 : i32
    %c0_i32_1 = arith.constant 0 : i32
    return %c0_i32, %c0_i32_0 : i32, i32
  }
  func.func @transform_8(%arg0: i32, %arg1: i32) -> (i32, i32) {
    %c0_i32 = arith.constant 0 : i32
    %c0_i32_0 = arith.constant 0 : i32
    %c0_i32_1 = arith.constant 0 : i32
    return %c0_i32, %c0_i32_0 : i32, i32
  }
  func.func @transform_9(%arg0: i32, %arg1: i32) -> (i32, i32) {
    %c0_i32 = arith.constant 0 : i32
    %c0_i32_0 = arith.constant 0 : i32
    %c0_i32_1 = arith.constant 0 : i32
    return %c0_i32, %c0_i32_0 : i32, i32
  }
  func.func @transform_10(%arg0: i32, %arg1: i32) -> (i32, i32) {
    %c0_i32 = arith.constant 0 : i32
    return %arg0, %arg1 : i32, i32
  }
}

module attributes {stable_mosaic.version = 11 : i64} {
  func.func @node_net_kernel(%arg0: i32, %arg1: memref<8x8xf32, #tpu.memory_space<vmem>>, %arg2: memref<8x1xi32, #tpu.memory_space<vmem>>, %arg3: memref<1x8xi32, #tpu.memory_space<vmem>>, %arg4: memref<8x32xf32, #tpu.memory_space<vmem>>, %arg5: memref<32x8xf32, #tpu.memory_space<vmem>>, %arg6: memref<32x8xf32, #tpu.memory_space<vmem>>, %arg7: memref<1x8xf32, #tpu.memory_space<vmem>>, %arg8: memref<1x8xf32, #tpu.memory_space<vmem>>, %arg9: memref<8x4xf32, #tpu.memory_space<vmem>>, %arg10: memref<1x4xf32, #tpu.memory_space<vmem>>, %arg11: memref<1x4xf32, #tpu.memory_space<vmem>>, %arg12: memref<8x4xf32, #tpu.memory_space<vmem>>) attributes {dimension_semantics = [#tpu.dimension_semantics<arbitrary>], iteration_bounds = array<i64: 1>, scalar_prefetch = 0 : i64, scratch_operands = 0 : i64, tpu.core_type = #tpu.core_type<tc>, window_params = [{pipeline_mode = #tpu.pipeline_mode<synchronous>, transform_indices = @transform_0, window_bounds = array<i64: 8, 8>}, {pipeline_mode = #tpu.pipeline_mode<synchronous>, transform_indices = @transform_1, window_bounds = array<i64: 8, 1>}, {pipeline_mode = #tpu.pipeline_mode<synchronous>, transform_indices = @transform_2, window_bounds = array<i64: 1, 8>}, {pipeline_mode = #tpu.pipeline_mode<synchronous>, transform_indices = @transform_3, window_bounds = array<i64: 8, 32>}, {pipeline_mode = #tpu.pipeline_mode<synchronous>, transform_indices = @transform_4, window_bounds = array<i64: 32, 8>}, {pipeline_mode = #tpu.pipeline_mode<synchronous>, transform_indices = @transform_5, window_bounds = array<i64: 32, 8>}, {pipeline_mode = #tpu.pipeline_mode<synchronous>, transform_indices = @transform_6, window_bounds = array<i64: 1, 8>}, {pipeline_mode = #tpu.pipeline_mode<synchronous>, transform_indices = @transform_7, window_bounds = array<i64: 1, 8>}, {pipeline_mode = #tpu.pipeline_mode<synchronous>, transform_indices = @transform_8, window_bounds = array<i64: 8, 4>}, {pipeline_mode = #tpu.pipeline_mode<synchronous>, transform_indices = @transform_9, window_bounds = array<i64: 1, 4>}, {pipeline_mode = #tpu.pipeline_mode<synchronous>, transform_indices = @transform_10, window_bounds = array<i64: 1, 4>}, {pipeline_mode = #tpu.pipeline_mode<synchronous>, transform_indices = @transform_11, window_bounds = array<i64: 8, 4>}]} {
    %c0 = arith.constant 0 : index
    %c0_0 = arith.constant 0 : index
    %0 = vector.load %arg1[%c0, %c0_0] : memref<8x8xf32, #tpu.memory_space<vmem>>, vector<8x8xf32>
    %1 = tpu.iota {dimensions = array<i32: 0>} : vector<8x8xi32>
    %2 = tpu.iota {dimensions = array<i32: 1>} : vector<8x8xi32>
    %3 = arith.cmpi eq, %1, %2 : vector<8x8xi32>
    %4 = arith.extui %3 : vector<8x8xi1> to vector<8x8xi32>
    %5 = arith.sitofp %4 : vector<8x8xi32> to vector<8x8xf32>
    %c0_1 = arith.constant 0 : index
    %c0_2 = arith.constant 0 : index
    %6 = vector.load %arg2[%c0_1, %c0_2] : memref<8x1xi32, #tpu.memory_space<vmem>>, vector<8x1xi32>
    %c0_3 = arith.constant 0 : index
    %c0_4 = arith.constant 0 : index
    %7 = vector.load %arg3[%c0_3, %c0_4] : memref<1x8xi32, #tpu.memory_space<vmem>>, vector<1x8xi32>
    %8 = vector.broadcast %6 : vector<8x1xi32> to vector<8x8xi32>
    %9 = vector.broadcast %7 : vector<1x8xi32> to vector<8x8xi32>
    %10 = arith.cmpi eq, %8, %9 : vector<8x8xi32>
    %11 = arith.extui %10 : vector<8x8xi1> to vector<8x8xi32>
    %12 = arith.sitofp %11 : vector<8x8xi32> to vector<8x8xf32>
    %13 = arith.mulf %12, %0 : vector<8x8xf32>
    %14 = arith.addf %13, %5 : vector<8x8xf32>
    %cst = arith.constant 9.99999997E-7 : f32
    %15 = vector.broadcast %cst : f32 to vector<8x8xf32>
    %16 = arith.addf %14, %15 : vector<8x8xf32>
    %cst_5 = arith.constant dense<0.000000e+00> : vector<8xf32>
    %17 = vector.multi_reduction <add>, %16, %cst_5 [0] : vector<8x8xf32> to vector<8xf32>
    %18 = vector.shape_cast %17 : vector<8xf32> to vector<1x8xf32>
    %19 = vector.broadcast %18 : vector<1x8xf32> to vector<8x8xf32>
    %20 = arith.divf %16, %19 : vector<8x8xf32>
    %cst_6 = arith.constant 1.000000e+00 : f32
    %21 = vector.broadcast %cst_6 : f32 to vector<8x8xf32>
    %22 = arith.subf %21, %5 : vector<8x8xf32>
    %23 = arith.mulf %20, %22 : vector<8x8xf32>
    %24 = math.absf %23 : vector<8x8xf32>
    %cst_7 = arith.constant dense<0.000000e+00> : vector<8xf32>
    %25 = vector.multi_reduction <add>, %24, %cst_7 [1] : vector<8x8xf32> to vector<8xf32>
    %26 = vector.shape_cast %25 : vector<8xf32> to vector<8x1xf32>
    %cst_8 = arith.constant 9.99999996E-13 : f32
    %27 = vector.broadcast %cst_8 : f32 to vector<8x1xf32>
    %28 = arith.maximumf %26, %27 : vector<8x1xf32>
    %29 = vector.broadcast %28 : vector<8x1xf32> to vector<8x8xf32>
    %30 = arith.divf %23, %29 : vector<8x8xf32>
    %c0_9 = arith.constant 0 : index
    %c0_10 = arith.constant 0 : index
    %31 = vector.load %arg4[%c0_9, %c0_10] : memref<8x32xf32, #tpu.memory_space<vmem>>, vector<8x32xf32>
    %cst_11 = arith.constant dense<0.000000e+00> : vector<8x32xf32>
    %32 = tpu.matmul %30, %31, %cst_11 {dimension_numbers = #tpu.dot_dimension_numbers<[1], [0], [0], [1], [0, 0, 1, 1], [], []>} : vector<8x8xf32>, vector<8x32xf32>, vector<8x32xf32> -> vector<8x32xf32>
    %c0_12 = arith.constant 0 : index
    %c0_13 = arith.constant 0 : index
    %33 = vector.load %arg5[%c0_12, %c0_13] : memref<32x8xf32, #tpu.memory_space<vmem>>, vector<32x8xf32>
    %cst_14 = arith.constant dense<0.000000e+00> : vector<8x8xf32>
    %34 = tpu.matmul %31, %33, %cst_14 {dimension_numbers = #tpu.dot_dimension_numbers<[1], [0], [0], [1], [0, 0, 1, 1], [], []>} : vector<8x32xf32>, vector<32x8xf32>, vector<8x8xf32> -> vector<8x8xf32>
    %c0_15 = arith.constant 0 : index
    %c0_16 = arith.constant 0 : index
    %35 = vector.load %arg6[%c0_15, %c0_16] : memref<32x8xf32, #tpu.memory_space<vmem>>, vector<32x8xf32>
    %cst_17 = arith.constant dense<0.000000e+00> : vector<8x8xf32>
    %36 = tpu.matmul %32, %35, %cst_17 {dimension_numbers = #tpu.dot_dimension_numbers<[1], [0], [0], [1], [0, 0, 1, 1], [], []>} : vector<8x32xf32>, vector<32x8xf32>, vector<8x8xf32> -> vector<8x8xf32>
    %37 = arith.addf %34, %36 : vector<8x8xf32>
    %c0_18 = arith.constant 0 : index
    %c0_19 = arith.constant 0 : index
    %38 = vector.load %arg7[%c0_18, %c0_19] : memref<1x8xf32, #tpu.memory_space<vmem>>, vector<1x8xf32>
    %39 = vector.broadcast %38 : vector<1x8xf32> to vector<8x8xf32>
    %40 = arith.mulf %37, %39 : vector<8x8xf32>
    %c0_20 = arith.constant 0 : index
    %c0_21 = arith.constant 0 : index
    %41 = vector.load %arg8[%c0_20, %c0_21] : memref<1x8xf32, #tpu.memory_space<vmem>>, vector<1x8xf32>
    %42 = vector.broadcast %41 : vector<1x8xf32> to vector<8x8xf32>
    %43 = arith.addf %40, %42 : vector<8x8xf32>
    %cst_22 = arith.constant 0.00999999977 : f32
    %44 = vector.broadcast %cst_22 : f32 to vector<8x8xf32>
    %45 = arith.mulf %44, %43 : vector<8x8xf32>
    %46 = arith.maximumf %43, %45 : vector<8x8xf32>
    %c0_23 = arith.constant 0 : index
    %c0_24 = arith.constant 0 : index
    %47 = vector.load %arg9[%c0_23, %c0_24] : memref<8x4xf32, #tpu.memory_space<vmem>>, vector<8x4xf32>
    %cst_25 = arith.constant dense<0.000000e+00> : vector<8x4xf32>
    %48 = tpu.matmul %46, %47, %cst_25 {dimension_numbers = #tpu.dot_dimension_numbers<[1], [0], [0], [1], [0, 0, 1, 1], [], []>} : vector<8x8xf32>, vector<8x4xf32>, vector<8x4xf32> -> vector<8x4xf32>
    %c0_26 = arith.constant 0 : index
    %c0_27 = arith.constant 0 : index
    %49 = vector.load %arg10[%c0_26, %c0_27] : memref<1x4xf32, #tpu.memory_space<vmem>>, vector<1x4xf32>
    %50 = vector.broadcast %49 : vector<1x4xf32> to vector<8x4xf32>
    %51 = arith.mulf %48, %50 : vector<8x4xf32>
    %c0_28 = arith.constant 0 : index
    %c0_29 = arith.constant 0 : index
    %52 = vector.load %arg11[%c0_28, %c0_29] : memref<1x4xf32, #tpu.memory_space<vmem>>, vector<1x4xf32>
    %53 = vector.broadcast %52 : vector<1x4xf32> to vector<8x4xf32>
    %54 = arith.addf %51, %53 : vector<8x4xf32>
    %c0_30 = arith.constant 0 : index
    %c0_31 = arith.constant 0 : index
    %55 = vector.load %arg12[%c0_30, %c0_31] : memref<8x4xf32, #tpu.memory_space<vmem>>, vector<8x4xf32>
    tpu.vector_store %arg12[%c0_30, %c0_31], %54 {strides = array<i32>} : memref<8x4xf32, #tpu.memory_space<vmem>>, vector<8x4xf32>,
    return
  }
  func.func @transform_0(%arg0: i32) -> (i32, i32) {
    %c0_i32 = arith.constant 0 : i32
    %c0_i32_0 = arith.constant 0 : i32
    %c0_i32_1 = arith.constant 0 : i32
    return %c0_i32, %c0_i32_0 : i32, i32
  }
  func.func @transform_1(%arg0: i32) -> (i32, i32) {
    %c0_i32 = arith.constant 0 : i32
    %c0_i32_0 = arith.constant 0 : i32
    %c0_i32_1 = arith.constant 0 : i32
    return %c0_i32, %c0_i32_0 : i32, i32
  }
  func.func @transform_2(%arg0: i32) -> (i32, i32) {
    %c0_i32 = arith.constant 0 : i32
    %c0_i32_0 = arith.constant 0 : i32
    %c0_i32_1 = arith.constant 0 : i32
    return %c0_i32, %c0_i32_0 : i32, i32
  }
  func.func @transform_3(%arg0: i32) -> (i32, i32) {
    %c0_i32 = arith.constant 0 : i32
    %c0_i32_0 = arith.constant 0 : i32
    %c0_i32_1 = arith.constant 0 : i32
    return %c0_i32, %c0_i32_0 : i32, i32
  }
  func.func @transform_4(%arg0: i32) -> (i32, i32) {
    %c0_i32 = arith.constant 0 : i32
    %c0_i32_0 = arith.constant 0 : i32
    %c0_i32_1 = arith.constant 0 : i32
    return %c0_i32, %c0_i32_0 : i32, i32
  }
  func.func @transform_5(%arg0: i32) -> (i32, i32) {
    %c0_i32 = arith.constant 0 : i32
    %c0_i32_0 = arith.constant 0 : i32
    %c0_i32_1 = arith.constant 0 : i32
    return %c0_i32, %c0_i32_0 : i32, i32
  }
  func.func @transform_6(%arg0: i32) -> (i32, i32) {
    %c0_i32 = arith.constant 0 : i32
    %c0_i32_0 = arith.constant 0 : i32
    %c0_i32_1 = arith.constant 0 : i32
    return %c0_i32, %c0_i32_0 : i32, i32
  }
  func.func @transform_7(%arg0: i32) -> (i32, i32) {
    %c0_i32 = arith.constant 0 : i32
    %c0_i32_0 = arith.constant 0 : i32
    %c0_i32_1 = arith.constant 0 : i32
    return %c0_i32, %c0_i32_0 : i32, i32
  }
  func.func @transform_8(%arg0: i32) -> (i32, i32) {
    %c0_i32 = arith.constant 0 : i32
    %c0_i32_0 = arith.constant 0 : i32
    %c0_i32_1 = arith.constant 0 : i32
    return %c0_i32, %c0_i32_0 : i32, i32
  }
  func.func @transform_9(%arg0: i32) -> (i32, i32) {
    %c0_i32 = arith.constant 0 : i32
    %c0_i32_0 = arith.constant 0 : i32
    %c0_i32_1 = arith.constant 0 : i32
    return %c0_i32, %c0_i32_0 : i32, i32
  }
  func.func @transform_10(%arg0: i32) -> (i32, i32) {
    %c0_i32 = arith.constant 0 : i32
    %c0_i32_0 = arith.constant 0 : i32
    %c0_i32_1 = arith.constant 0 : i32
    return %c0_i32, %c0_i32_0 : i32, i32
  }
  func.func @transform_11(%arg0: i32) -> (i32, i32) {
    %c0_i32 = arith.constant 0 : i32
    %c0_i32_0 = arith.constant 0 : i32
    %c0_i32_1 = arith.constant 0 : i32
    return %c0_i32, %c0_i32_0 : i32, i32
  }
}

</mosaic_0001>

<llo_original>
// kernel: classifier_gnn_forward.3
$region0: #{classifier_gnn_forward.3}
  #allocation0 [shape = 'u32[]', space=smem, size = 0x4, offset = 0x4, fixed_abs, tag = 'smem constant byte address 0x4 - core index']
  #allocation1 [shape = 'u32[144,128]{1,0:T(1,128)}', space=vmem, size = 0x12000, scoped, tag = 'internal scratch']
  %s0 = inlined_call_operand.vmem [shape: f32[8,8], index: 0, kind: input, shape index: {}]
  %s1 = inlined_call_operand.vmem [shape: s32[8,1], index: 1, kind: input, shape index: {}]
  %s2 = inlined_call_operand.vmem [shape: s32[1,8], index: 2, kind: input, shape index: {}]
  %s3 = inlined_call_operand.vmem [shape: f32[8,32], index: 3, kind: input, shape index: {}]
  %s4 = inlined_call_operand.vmem [shape: f32[32,8], index: 4, kind: input, shape index: {}]
  %s5 = inlined_call_operand.vmem [shape: f32[32,8], index: 5, kind: input, shape index: {}]
  %s6 = inlined_call_operand.vmem [shape: f32[1,8], index: 6, kind: input, shape index: {}]
  %s7 = inlined_call_operand.vmem [shape: f32[1,8], index: 7, kind: input, shape index: {}]
  %s8 = inlined_call_operand.vmem [shape: f32[8,4], index: 8, kind: input, shape index: {}]
  %s9 = inlined_call_operand.vmem [shape: f32[1,4], index: 9, kind: input, shape index: {}]
  %s10 = inlined_call_operand.vmem [shape: f32[1,4], index: 10, kind: input, shape index: {}]
  %s11 = inlined_call_operand.vmem [shape: f32[8,4], index: 11, kind: output, shape index: {}]
  %s12 = sld [smem:[#allocation0]]
  $region54: #{classifier_gnn_forward.3} parent=0
    _
  %s14 = ssub.s32 1, %s12
  %s15 = scalar_select 0, %s14, %s12
  // Predicated region
  $region2: #{classifier_gnn_forward.3} parent=0 // pred_check
    _
  $region3: #{classifier_gnn_forward.3} parent=0 // pred_check_branch
    %17 = sbr.rel (0) target = $region5
  $region4: #{classifier_gnn_forward.3} parent=0 // pred_region
    _
  $region5: #{classifier_gnn_forward.3} parent=0 // pred_fallthru
    _
  // Predicated region
  $region6: #{classifier_gnn_forward.3} parent=0 // pred_check
    _
  $region7: #{classifier_gnn_forward.3} parent=0 // pred_check_branch
    %19 = sbr.rel (0) target = $region9
  $region8: #{classifier_gnn_forward.3} parent=0 // pred_region
    _
  $region9: #{classifier_gnn_forward.3} parent=0 // pred_fallthru
    _
  // Predicated region
  $region10: #{classifier_gnn_forward.3} parent=0 // pred_check
    _
  $region11: #{classifier_gnn_forward.3} parent=0 // pred_check_branch
    %21 = sbr.rel (0) target = $region13
  $region12: #{classifier_gnn_forward.3} parent=0 // pred_region
    _
  $region13: #{classifier_gnn_forward.3} parent=0 // pred_fallthru
    _
  // Predicated region
  $region14: #{classifier_gnn_forward.3} parent=0 // pred_check
    _
  $region15: #{classifier_gnn_forward.3} parent=0 // pred_check_branch
    %23 = sbr.rel (0) target = $region17
  $region16: #{classifier_gnn_forward.3} parent=0 // pred_region
    _
  $region17: #{classifier_gnn_forward.3} parent=0 // pred_fallthru
    _
  // Predicated region
  $region18: #{classifier_gnn_forward.3} parent=0 // pred_check
    _
  $region19: #{classifier_gnn_forward.3} parent=0 // pred_check_branch
    %25 = sbr.rel (0) target = $region21
  $region20: #{classifier_gnn_forward.3} parent=0 // pred_region
    _
  $region21: #{classifier_gnn_forward.3} parent=0 // pred_fallthru
    _
  // Predicated region
  $region22: #{classifier_gnn_forward.3} parent=0 // pred_check
    _
  $region23: #{classifier_gnn_forward.3} parent=0 // pred_check_branch
    %27 = sbr.rel (0) target = $region25
  $region24: #{classifier_gnn_forward.3} parent=0 // pred_region
    _
  $region25: #{classifier_gnn_forward.3} parent=0 // pred_fallthru
    _
  // Predicated region
  $region26: #{classifier_gnn_forward.3} parent=0 // pred_check
    _
  $region27: #{classifier_gnn_forward.3} parent=0 // pred_check_branch
    %29 = sbr.rel (0) target = $region29
  $region28: #{classifier_gnn_forward.3} parent=0 // pred_region
    _
  $region29: #{classifier_gnn_forward.3} parent=0 // pred_fallthru
    _
  // Predicated region
  $region30: #{classifier_gnn_forward.3} parent=0 // pred_check
    _
  $region31: #{classifier_gnn_forward.3} parent=0 // pred_check_branch
    %31 = sbr.rel (0) target = $region33
  $region32: #{classifier_gnn_forward.3} parent=0 // pred_region
    _
  $region33: #{classifier_gnn_forward.3} parent=0 // pred_fallthru
    _
  // Predicated region
  $region34: #{classifier_gnn_forward.3} parent=0 // pred_check
    _
  $region35: #{classifier_gnn_forward.3} parent=0 // pred_check_branch
    %33 = sbr.rel (0) target = $region37
  $region36: #{classifier_gnn_forward.3} parent=0 // pred_region
    _
  $region37: #{classifier_gnn_forward.3} parent=0 // pred_fallthru
    _
  // Predicated region
  $region38: #{classifier_gnn_forward.3} parent=0 // pred_check
    _
  $region39: #{classifier_gnn_forward.3} parent=0 // pred_check_branch
    %35 = sbr.rel (0) target = $region41
  $region40: #{classifier_gnn_forward.3} parent=0 // pred_region
    _
  $region41: #{classifier_gnn_forward.3} parent=0 // pred_fallthru
    _
  // Predicated region
  $region42: #{classifier_gnn_forward.3} parent=0 // pred_check
    _
  $region43: #{classifier_gnn_forward.3} parent=0 // pred_check_branch
    %37 = sbr.rel (0) target = $region45
  $region44: #{classifier_gnn_forward.3} parent=0 // pred_region
    _
  $region45: #{classifier_gnn_forward.3} parent=0 // pred_fallthru
    _
  %v38 = vld [vmem:[%s0] sm:$0xff]
  %v39 = vlaneseq
  %v40 = vshrl.u32 %v39, 7
  %v41 = vlaneseq
  %v42 = vand.u32 %v41, 127
  %vm43 = vcmp.eq.s32.totalorder %v40, %v42
  %v44 = vsel %vm43, 1, 0
  %v45 = vcvt.s32.f32 %v44
  %v46 = vld [vmem:[%s1] sm:$0xff]
  %v47 = vld [vmem:[%s2] sm:$0x1]
  %48 = vset.pattern.permute.xlu0 0
  %49 = vperm.xlu0 %48, %v46
  %v50 = vpop.permute.xlu0 %49
  %v51 = vlaneseq
  %v52 = vshrl.u32 %v51, 7
  %v53 = vsub.s32 0, %v52
  %v54 = vrot.slane %v47, %v53
  %vm55 = vcmp.eq.s32.totalorder %v50, %v54
  %v56 = vsel %vm55, 1, 0
  %v57 = vcvt.s32.f32 %v56
  %v58 = vmul.f32 %v57, %v38
  %v59 = vadd.f32 %v58, %v45
  %v60 = vadd.f32 %v59, 1e-06
  %vm61 = vcmask 64512
  %v62 = vsel %vm61, %v60, 0.0
  %v63 = vrot.slane %v62, 4
  %v64 = vadd.f32 %v62, %v63
  %v65 = vrot.slane %v64, 2
  %v66 = vadd.f32 %v64, %v65
  %v67 = vrot.slane %v66, 1
  %v68 = vadd.f32 %v66, %v67
  %v69 = vrcp.pop %v68
  %v70 = vmul.f32 %v60, %v69
  %v71 = vsub.f32 1.0, %v45
  %v72 = vmul.f32 %v70, %v71
  %v73 = vand.u32 2147483647, %v72
  %v74 = vsel %vm61, %v73, 0.0
  %75 = vadd.xlane.f32.xlu0 %v74
  %v76 = vpop.xlane.xlu0 %75
  %v77 = vmax.f32 %v76, 1e-12
  %v78 = vrcp.pop %v77
  %v79 = vmul.f32 %v72, %v78
  %v80 = vld [vmem:[%s3] sm:$0xff]
  %v82 = vsel %vm61, %v79, 0
  %84 = vmatprep.subr.mxu0 0.0
  %85 = vmatpush1.msra.mxu0 0.0
  %86 = vmatprep.subr.mxu0 0.0
  %87 = vmatpush1.msra.mxu0 0.0
  %88 = vmatprep.subr.mxu0 0.0
  %89 = vmatpush1.msra.mxu0 0.0
  %90 = vmatprep.subr.mxu0 0.0
  %91 = vmatpush1.msra.mxu0 0.0
  %92 = vmatprep.subr.mxu0 0.0
  %93 = vmatpush1.msra.mxu0 0.0
  %94 = vmatprep.subr.mxu0 0.0
  %95 = vmatpush1.msra.mxu0 0.0
  %96 = vmatprep.subr.mxu0 0.0
  %97 = vmatpush1.msra.mxu0 0.0
  %98 = vmatprep.subr.mxu0 0.0
  %99 = vmatpush1.msra.mxu0 0.0
  %100 = vmatprep.subr.mxu0 0.0
  %101 = vmatpush1.msra.mxu0 0.0
  %102 = vmatprep.subr.mxu0 0.0
  %103 = vmatpush1.msra.mxu0 0.0
  %104 = vmatprep.subr.mxu0 0.0
  %105 = vmatpush1.msra.mxu0 0.0
  %106 = vmatprep.subr.mxu0 0.0
  %107 = vmatpush1.msra.mxu0 0.0
  %108 = vmatprep.subr.mxu0 0.0
  %109 = vmatpush1.msra.mxu0 0.0
  %110 = vmatprep.subr.mxu0 0.0
  %111 = vmatpush1.msra.mxu0 0.0
  %112 = vmatprep.subr.mxu0 0.0
  %113 = vmatpush1.msra.mxu0 0.0
  %114 = vmatprep.subr.mxu0 0.0
  %115 = vmatpush1.msra.mxu0 %v80
  %116 = vmatprep.subr.mxu0 0.0
  %117 = vmatpush2.msra.mxu0 0.0
  %118 = vmatprep.subr.mxu0 0.0
  %119 = vmatpush2.msra.mxu0 0.0
  %120 = vmatprep.subr.mxu0 0.0
  %121 = vmatpush2.msra.mxu0 0.0
  %122 = vmatprep.subr.mxu0 0.0
  %123 = vmatpush2.msra.mxu0 0.0
  %124 = vmatprep.subr.mxu0 0.0
  %125 = vmatpush2.msra.mxu0 0.0
  %126 = vmatprep.subr.mxu0 0.0
  %127 = vmatpush2.msra.mxu0 0.0
  %128 = vmatprep.subr.mxu0 0.0
  %129 = vmatpush2.msra.mxu0 0.0
  %130 = vmatprep.subr.mxu0 0.0
  %131 = vmatpush2.msra.mxu0 0.0
  %132 = vmatprep.subr.mxu0 0.0
  %133 = vmatpush2.msra.mxu0 0.0
  %134 = vmatprep.subr.mxu0 0.0
  %135 = vmatpush2.msra.mxu0 0.0
  %136 = vmatprep.subr.mxu0 0.0
  %137 = vmatpush2.msra.mxu0 0.0
  %138 = vmatprep.subr.mxu0 0.0
  %139 = vmatpush2.msra.mxu0 0.0
  %140 = vmatprep.subr.mxu0 0.0
  %141 = vmatpush2.msra.mxu0 0.0
  %142 = vmatprep.subr.mxu0 0.0
  %143 = vmatpush2.msra.mxu0 0.0
  %144 = vmatprep.subr.mxu0 0.0
  %145 = vmatpush2.msra.mxu0 0.0
  %146 = vmatprep.subr.mxu0 0.0
  %147 = vmatpush2.msra.mxu0 0.0
  %148 = vmatprep.mubr.f32.mxu0 0.0
  %149 = vmatmul.mubr.f32.gmra.mxu0 %v82
  %v150 = vpop.f32.mrf.mxu0
  %v151 = vadd.f32 0.0, %v150
  %v152 = vpop.f32.mrf.mxu0
  %153 = vdwg.mxu0
  %v154 = vld [vmem:[%s4] sm:$0xff]
  %v155 = vld [vmem:[%s4 + $0x8] sm:$0xff]
  %v156 = vld [vmem:[%s4 + $0x10] sm:$0xff]
  %v157 = vld [vmem:[%s4 + $0x18] sm:$0xff]
  %v158 = vld [vmem:[%s5] sm:$0xff]
  %v159 = vld [vmem:[%s5 + $0x8] sm:$0xff]
  %v160 = vld [vmem:[%s5 + $0x10] sm:$0xff]
  %v161 = vld [vmem:[%s5 + $0x18] sm:$0xff]
  %vm162 = vcmask 261120
  %v164 = vsel %vm162, %v151, 0
  %166 = vmatprep.subr.mxu0 0.0
  %167 = vmatpush1.msra.mxu0 0.0
  %168 = vmatprep.subr.mxu0 0.0
  %169 = vmatpush1.msra.mxu0 0.0
  %170 = vmatprep.subr.mxu0 0.0
  %171 = vmatpush1.msra.mxu0 0.0
  %172 = vmatprep.subr.mxu0 0.0
  %173 = vmatpush1.msra.mxu0 0.0
  %174 = vmatprep.subr.mxu0 0.0
  %175 = vmatpush1.msra.mxu0 0.0
  %176 = vmatprep.subr.mxu0 0.0
  %177 = vmatpush1.msra.mxu0 0.0
  %178 = vmatprep.subr.mxu0 0.0
  %179 = vmatpush1.msra.mxu0 0.0
  %180 = vmatprep.subr.mxu0 0.0
  %181 = vmatpush1.msra.mxu0 0.0
  %182 = vmatprep.subr.mxu0 0.0
  %183 = vmatpush1.msra.mxu0 0.0
  %184 = vmatprep.subr.mxu0 0.0
  %185 = vmatpush1.msra.mxu0 0.0
  %186 = vmatprep.subr.mxu0 0.0
  %187 = vmatpush1.msra.mxu0 0.0
  %188 = vmatprep.subr.mxu0 0.0
  %189 = vmatpush1.msra.mxu0 0.0
  %190 = vmatprep.subr.mxu0 0.0
  %191 = vmatpush1.msra.mxu0 %v161
  %192 = vmatprep.subr.mxu0 0.0
  %193 = vmatpush1.msra.mxu0 %v160
  %194 = vmatprep.subr.mxu0 0.0
  %195 = vmatpush1.msra.mxu0 %v159
  %196 = vmatprep.subr.mxu0 0.0
  %197 = vmatpush1.msra.mxu0 %v158
  %198 = vmatprep.subr.mxu0 0.0
  %199 = vmatpush2.msra.mxu0 0.0
  %200 = vmatprep.subr.mxu0 0.0
  %201 = vmatpush2.msra.mxu0 0.0
  %202 = vmatprep.subr.mxu0 0.0
  %203 = vmatpush2.msra.mxu0 0.0
  %204 = vmatprep.subr.mxu0 0.0
  %205 = vmatpush2.msra.mxu0 0.0
  %206 = vmatprep.subr.mxu0 0.0
  %207 = vmatpush2.msra.mxu0 0.0
  %208 = vmatprep.subr.mxu0 0.0
  %209 = vmatpush2.msra.mxu0 0.0
  %210 = vmatprep.subr.mxu0 0.0
  %211 = vmatpush2.msra.mxu0 0.0
  %212 = vmatprep.subr.mxu0 0.0
  %213 = vmatpush2.msra.mxu0 0.0
  %214 = vmatprep.subr.mxu0 0.0
  %215 = vmatpush2.msra.mxu0 0.0
  %216 = vmatprep.subr.mxu0 0.0
  %217 = vmatpush2.msra.mxu0 0.0
  %218 = vmatprep.subr.mxu0 0.0
  %219 = vmatpush2.msra.mxu0 0.0
  %220 = vmatprep.subr.mxu0 0.0
  %221 = vmatpush2.msra.mxu0 0.0
  %222 = vmatprep.subr.mxu0 0.0
  %223 = vmatpush2.msra.mxu0 0.0
  %224 = vmatprep.subr.mxu0 0.0
  %225 = vmatpush2.msra.mxu0 0.0
  %226 = vmatprep.subr.mxu0 0.0
  %227 = vmatpush2.msra.mxu0 0.0
  %228 = vmatprep.subr.mxu0 0.0
  %229 = vmatpush2.msra.mxu0 0.0
  %230 = vmatprep.mubr.f32.mxu0 0.0
  %231 = vmatmul.mubr.f32.gmra.mxu0 %v164
  %v232 = vpop.f32.mrf.mxu0
  %v233 = vadd.f32 0.0, %v232
  %v234 = vpop.f32.mrf.mxu0
  %235 = vdwg.mxu0
  %v237 = vsel %vm162, %v80, 0
  %239 = vmatprep.subr.mxu0 0.0
  %240 = vmatpush1.msra.mxu0 0.0
  %241 = vmatprep.subr.mxu0 0.0
  %242 = vmatpush1.msra.mxu0 0.0
  %243 = vmatprep.subr.mxu0 0.0
  %244 = vmatpush1.msra.mxu0 0.0
  %245 = vmatprep.subr.mxu0 0.0
  %246 = vmatpush1.msra.mxu0 0.0
  %247 = vmatprep.subr.mxu0 0.0
  %248 = vmatpush1.msra.mxu0 0.0
  %249 = vmatprep.subr.mxu0 0.0
  %250 = vmatpush1.msra.mxu0 0.0
  %251 = vmatprep.subr.mxu0 0.0
  %252 = vmatpush1.msra.mxu0 0.0
  %253 = vmatprep.subr.mxu0 0.0
  %254 = vmatpush1.msra.mxu0 0.0
  %255 = vmatprep.subr.mxu0 0.0
  %256 = vmatpush1.msra.mxu0 0.0
  %257 = vmatprep.subr.mxu0 0.0
  %258 = vmatpush1.msra.mxu0 0.0
  %259 = vmatprep.subr.mxu0 0.0
  %260 = vmatpush1.msra.mxu0 0.0
  %261 = vmatprep.subr.mxu0 0.0
  %262 = vmatpush1.msra.mxu0 0.0
  %263 = vmatprep.subr.mxu0 0.0
  %264 = vmatpush1.msra.mxu0 %v157
  %265 = vmatprep.subr.mxu0 0.0
  %266 = vmatpush1.msra.mxu0 %v156
  %267 = vmatprep.subr.mxu0 0.0
  %268 = vmatpush1.msra.mxu0 %v155
  %269 = vmatprep.subr.mxu0 0.0
  %270 = vmatpush1.msra.mxu0 %v154
  %271 = vmatprep.subr.mxu0 0.0
  %272 = vmatpush2.msra.mxu0 0.0
  %273 = vmatprep.subr.mxu0 0.0
  %274 = vmatpush2.msra.mxu0 0.0
  %275 = vmatprep.subr.mxu0 0.0
  %276 = vmatpush2.msra.mxu0 0.0
  %277 = vmatprep.subr.mxu0 0.0
  %278 = vmatpush2.msra.mxu0 0.0
  %279 = vmatprep.subr.mxu0 0.0
  %280 = vmatpush2.msra.mxu0 0.0
  %281 = vmatprep.subr.mxu0 0.0
  %282 = vmatpush2.msra.mxu0 0.0
  %283 = vmatprep.subr.mxu0 0.0
  %284 = vmatpush2.msra.mxu0 0.0
  %285 = vmatprep.subr.mxu0 0.0
  %286 = vmatpush2.msra.mxu0 0.0
  %287 = vmatprep.subr.mxu0 0.0
  %288 = vmatpush2.msra.mxu0 0.0
  %289 = vmatprep.subr.mxu0 0.0
  %290 = vmatpush2.msra.mxu0 0.0
  %291 = vmatprep.subr.mxu0 0.0
  %292 = vmatpush2.msra.mxu0 0.0
  %293 = vmatprep.subr.mxu0 0.0
  %294 = vmatpush2.msra.mxu0 0.0
  %295 = vmatprep.subr.mxu0 0.0
  %296 = vmatpush2.msra.mxu0 0.0
  %297 = vmatprep.subr.mxu0 0.0
  %298 = vmatpush2.msra.mxu0 0.0
  %299 = vmatprep.subr.mxu0 0.0
  %300 = vmatpush2.msra.mxu0 0.0
  %301 = vmatprep.subr.mxu0 0.0
  %302 = vmatpush2.msra.mxu0 0.0
  %303 = vmatprep.mubr.f32.mxu0 0.0
  %304 = vmatmul.mubr.f32.gmra.mxu0 %v237
  %v305 = vpop.f32.mrf.mxu0
  %v306 = vadd.f32 %v233, %v305
  %v307 = vpop.f32.mrf.mxu0
  %308 = vdwg.mxu0
  %v309 = vld [vmem:[%s6] sm:$0x1]
  %v311 = vlaneseq
  %v312 = vshrl.u32 %v311, 7
  %v313 = vsub.s32 0, %v312
  %v314 = vrot.slane %v309, %v313
  %v316 = vmul.f32 %v306, %v314
  %v317 = vld [vmem:[%s7] sm:$0x1]
  %v319 = vlaneseq
  %v320 = vshrl.u32 %v319, 7
  %v321 = vsub.s32 0, %v320
  %v322 = vrot.slane %v317, %v321
  %v324 = vadd.f32 %v316, %v322
  %v325 = vmul.f32 %v324, 0.01
  %v326 = vmax.f32 %v324, %v325
  %v327 = vld [vmem:[%s8] sm:$0xff]
  %v329 = vsel %vm61, %v326, 0
  %331 = vmatprep.subr.mxu0 0.0
  %332 = vmatpush1.msra.mxu0 0.0
  %333 = vmatprep.subr.mxu0 0.0
  %334 = vmatpush1.msra.mxu0 0.0
  %335 = vmatprep.subr.mxu0 0.0
  %336 = vmatpush1.msra.mxu0 0.0
  %337 = vmatprep.subr.mxu0 0.0
  %338 = vmatpush1.msra.mxu0 0.0
  %339 = vmatprep.subr.mxu0 0.0
  %340 = vmatpush1.msra.mxu0 0.0
  %341 = vmatprep.subr.mxu0 0.0
  %342 = vmatpush1.msra.mxu0 0.0
  %343 = vmatprep.subr.mxu0 0.0
  %344 = vmatpush1.msra.mxu0 0.0
  %345 = vmatprep.subr.mxu0 0.0
  %346 = vmatpush1.msra.mxu0 0.0
  %347 = vmatprep.subr.mxu0 0.0
  %348 = vmatpush1.msra.mxu0 0.0
  %349 = vmatprep.subr.mxu0 0.0
  %350 = vmatpush1.msra.mxu0 0.0
  %351 = vmatprep.subr.mxu0 0.0
  %352 = vmatpush1.msra.mxu0 0.0
  %353 = vmatprep.subr.mxu0 0.0
  %354 = vmatpush1.msra.mxu0 0.0
  %355 = vmatprep.subr.mxu0 0.0
  %356 = vmatpush1.msra.mxu0 0.0
  %357 = vmatprep.subr.mxu0 0.0
  %358 = vmatpush1.msra.mxu0 0.0
  %359 = vmatprep.subr.mxu0 0.0
  %360 = vmatpush1.msra.mxu0 0.0
  %361 = vmatprep.subr.mxu0 0.0
  %362 = vmatpush1.msra.mxu0 %v327
  %363 = vmatprep.subr.mxu0 0.0
  %364 = vmatpush2.msra.mxu0 0.0
  %365 = vmatprep.subr.mxu0 0.0
  %366 = vmatpush2.msra.mxu0 0.0
  %367 = vmatprep.subr.mxu0 0.0
  %368 = vmatpush2.msra.mxu0 0.0
  %369 = vmatprep.subr.mxu0 0.0
  %370 = vmatpush2.msra.mxu0 0.0
  %371 = vmatprep.subr.mxu0 0.0
  %372 = vmatpush2.msra.mxu0 0.0
  %373 = vmatprep.subr.mxu0 0.0
  %374 = vmatpush2.msra.mxu0 0.0
  %375 = vmatprep.subr.mxu0 0.0
  %376 = vmatpush2.msra.mxu0 0.0
  %377 = vmatprep.subr.mxu0 0.0
  %378 = vmatpush2.msra.mxu0 0.0
  %379 = vmatprep.subr.mxu0 0.0
  %380 = vmatpush2.msra.mxu0 0.0
  %381 = vmatprep.subr.mxu0 0.0
  %382 = vmatpush2.msra.mxu0 0.0
  %383 = vmatprep.subr.mxu0 0.0
  %384 = vmatpush2.msra.mxu0 0.0
  %385 = vmatprep.subr.mxu0 0.0
  %386 = vmatpush2.msra.mxu0 0.0
  %387 = vmatprep.subr.mxu0 0.0
  %388 = vmatpush2.msra.mxu0 0.0
  %389 = vmatprep.subr.mxu0 0.0
  %390 = vmatpush2.msra.mxu0 0.0
  %391 = vmatprep.subr.mxu0 0.0
  %392 = vmatpush2.msra.mxu0 0.0
  %393 = vmatprep.subr.mxu0 0.0
  %394 = vmatpush2.msra.mxu0 0.0
  %395 = vmatprep.mubr.f32.mxu0 0.0
  %396 = vmatmul.mubr.f32.gmra.mxu0 %v329
  %v397 = vpop.f32.mrf.mxu0
  %v398 = vadd.f32 0.0, %v397
  %v399 = vpop.f32.mrf.mxu0
  %400 = vdwg.mxu0
  %v401 = vld [vmem:[%s9] sm:$0x1]
  %v403 = vlaneseq
  %v404 = vshrl.u32 %v403, 7
  %v405 = vsub.s32 0, %v404
  %v406 = vrot.slane %v401, %v405
  %v408 = vmul.f32 %v398, %v406
  %v409 = vld [vmem:[%s10] sm:$0x1]
  %v411 = vlaneseq
  %v412 = vshrl.u32 %v411, 7
  %v413 = vsub.s32 0, %v412
  %v414 = vrot.slane %v409, %v413
  %v416 = vadd.f32 %v408, %v414
  %vm417 = vcmask 31744
  %418 = vst.msk [vmem:[%s11] sm:$0xff] %vm417, %v416
  // Predicated region
  $region46: #{classifier_gnn_forward.3} parent=0 // pred_check
    _
  $region47: #{classifier_gnn_forward.3} parent=0 // pred_check_branch
    %420 = sbr.rel (0) target = $region49
  $region48: #{classifier_gnn_forward.3} parent=0 // pred_region
    _
  $region49: #{classifier_gnn_forward.3} parent=0 // pred_fallthru
    _
  // Predicated region
  $region50: #{classifier_gnn_forward.3} parent=0 // pred_check
    _
  $region51: #{classifier_gnn_forward.3} parent=0 // pred_check_branch
    %422 = sbr.rel (0) target = $region53
  $region52: #{classifier_gnn_forward.3} parent=0 // pred_region
    _
  $region53: #{classifier_gnn_forward.3} parent=0 // pred_fallthru
    _

// kernel: classifier_gnn_forward.2
$region0: #{classifier_gnn_forward.2}
  #allocation0 [shape = 'u32[]', space=smem, size = 0x4, offset = 0x4, fixed_abs, tag = 'smem constant byte address 0x4 - core index']
  #allocation1 [shape = 'u32[144,128]{1,0:T(1,128)}', space=vmem, size = 0x12000, scoped, tag = 'internal scratch']
  #allocation2 [shape = 'f32[1,1]{1,0:T(1,128)S(1)}', space=vmem, size = 0x200, scoped, tag = 'scoped memory for classifier_gnn_forward.2']
  %s0 = inlined_call_operand.vmem [shape: bf16[8,32], index: 0, kind: input, shape index: {}, may-alias: {0,1}]
  %s1 = inlined_call_operand.vmem [shape: bf16[8,32], index: 1, kind: input, shape index: {}, may-alias: {0,1}]
  %s2 = inlined_call_operand.vmem [shape: bf16[32,64], index: 2, kind: input, shape index: {}]
  %s3 = inlined_call_operand.vmem [shape: f32[1,64], index: 3, kind: input, shape index: {}]
  %s4 = inlined_call_operand.vmem [shape: f32[1,64], index: 4, kind: input, shape index: {}]
  %s5 = inlined_call_operand.vmem [shape: bf16[64,32], index: 5, kind: input, shape index: {}]
  %s6 = inlined_call_operand.vmem [shape: f32[1,32], index: 6, kind: input, shape index: {}]
  %s7 = inlined_call_operand.vmem [shape: f32[1,32], index: 7, kind: input, shape index: {}]
  %s8 = inlined_call_operand.vmem [shape: f32[1,32], index: 8, kind: input, shape index: {}]
  %s9 = inlined_call_operand.<no memory space> [shape: f32[1,1], index: 9, kind: input, shape index: {}]
  %s10 = inlined_call_operand.vmem [shape: f32[8,8], index: 10, kind: output, shape index: {}]
  %s11 = sld [smem:[#allocation0]]
  $region50: #{classifier_gnn_forward.2} parent=0
    _
  %s13 = ssub.s32 1, %s11
  %s14 = scalar_select 0, %s13, %s11
  %v15 = vstv %s9
  %16 = vst [vmem:[#allocation2] sm:$0x1] %v15
  // Predicated region
  $region2: #{classifier_gnn_forward.2} parent=0 // pred_check
    _
  $region3: #{classifier_gnn_forward.2} parent=0 // pred_check_branch
    %18 = sbr.rel (0) target = $region5
  $region4: #{classifier_gnn_forward.2} parent=0 // pred_region
    _
  $region5: #{classifier_gnn_forward.2} parent=0 // pred_fallthru
    _
  // Predicated region
  $region6: #{classifier_gnn_forward.2} parent=0 // pred_check
    _
  $region7: #{classifier_gnn_forward.2} parent=0 // pred_check_branch
    %20 = sbr.rel (0) target = $region9
  $region8: #{classifier_gnn_forward.2} parent=0 // pred_region
    _
  $region9: #{classifier_gnn_forward.2} parent=0 // pred_fallthru
    _
  // Predicated region
  $region10: #{classifier_gnn_forward.2} parent=0 // pred_check
    _
  $region11: #{classifier_gnn_forward.2} parent=0 // pred_check_branch
    %22 = sbr.rel (0) target = $region13
  $region12: #{classifier_gnn_forward.2} parent=0 // pred_region
    _
  $region13: #{classifier_gnn_forward.2} parent=0 // pred_fallthru
    _
  // Predicated region
  $region14: #{classifier_gnn_forward.2} parent=0 // pred_check
    _
  $region15: #{classifier_gnn_forward.2} parent=0 // pred_check_branch
    %24 = sbr.rel (0) target = $region17
  $region16: #{classifier_gnn_forward.2} parent=0 // pred_region
    _
  $region17: #{classifier_gnn_forward.2} parent=0 // pred_fallthru
    _
  // Predicated region
  $region18: #{classifier_gnn_forward.2} parent=0 // pred_check
    _
  $region19: #{classifier_gnn_forward.2} parent=0 // pred_check_branch
    %26 = sbr.rel (0) target = $region21
  $region20: #{classifier_gnn_forward.2} parent=0 // pred_region
    _
  $region21: #{classifier_gnn_forward.2} parent=0 // pred_fallthru
    _
  // Predicated region
  $region22: #{classifier_gnn_forward.2} parent=0 // pred_check
    _
  $region23: #{classifier_gnn_forward.2} parent=0 // pred_check_branch
    %28 = sbr.rel (0) target = $region25
  $region24: #{classifier_gnn_forward.2} parent=0 // pred_region
    _
  $region25: #{classifier_gnn_forward.2} parent=0 // pred_fallthru
    _
  // Predicated region
  $region26: #{classifier_gnn_forward.2} parent=0 // pred_check
    _
  $region27: #{classifier_gnn_forward.2} parent=0 // pred_check_branch
    %30 = sbr.rel (0) target = $region29
  $region28: #{classifier_gnn_forward.2} parent=0 // pred_region
    _
  $region29: #{classifier_gnn_forward.2} parent=0 // pred_fallthru
    _
  // Predicated region
  $region30: #{classifier_gnn_forward.2} parent=0 // pred_check
    _
  $region31: #{classifier_gnn_forward.2} parent=0 // pred_check_branch
    %32 = sbr.rel (0) target = $region33
  $region32: #{classifier_gnn_forward.2} parent=0 // pred_region
    _
  $region33: #{classifier_gnn_forward.2} parent=0 // pred_fallthru
    _
  // Predicated region
  $region34: #{classifier_gnn_forward.2} parent=0 // pred_check
    _
  $region35: #{classifier_gnn_forward.2} parent=0 // pred_check_branch
    %34 = sbr.rel (0) target = $region37
  $region36: #{classifier_gnn_forward.2} parent=0 // pred_region
    _
  $region37: #{classifier_gnn_forward.2} parent=0 // pred_fallthru
    _
  // Predicated region
  $region38: #{classifier_gnn_forward.2} parent=0 // pred_check
    _
  $region39: #{classifier_gnn_forward.2} parent=0 // pred_check_branch
    %36 = sbr.rel (0) target = $region41
  $region40: #{classifier_gnn_forward.2} parent=0 // pred_region
    _
  $region41: #{classifier_gnn_forward.2} parent=0 // pred_fallthru
    _
  %v38 = vld [vmem:[%s0] sm:$0xf]
  %v39 = vld [vmem:[%s1] sm:$0xf]
  %v42 = vunpack.c.l.s4 1966171168
  %v43 = vunpack.c.0.s8 %v42
  %v44 = vlaneseq
  %v45 = vshrl.u32 %v44, 7
  %v46 = vsub.s32 %v43, %v45
  %v47 = vrot.slane %v38, %v46
  %v48 = vcombine.high %v47, %v47
  %v50 = vunpack.c.l.s4 1966171168
  %v51 = vunpack.c.0.s8 %v50
  %v52 = vlaneseq
  %v53 = vshrl.u32 %v52, 7
  %v54 = vsub.s32 %v51, %v53
  %v55 = vrot.slane %v47, %v54
  %v57 = vunpack.c.l.s4 1966171168
  %v58 = vunpack.c.0.s8 %v57
  %v59 = vlaneseq
  %v60 = vshrl.u32 %v59, 7
  %v61 = vsub.s32 %v58, %v60
  %v62 = vrot.slane %v48, %v61
  %v63 = vcombine.high %v55, %v55
  %v64 = vcombine.high %v62, %v62
  %v65 = vunpack.i.l.s16 %v55
  %v66 = vunpack.i.h.s16 %v55
  %v67 = vunpack.i.l.s16 %v62
  %v68 = vunpack.i.h.s16 %v62
  %v69 = vunpack.i.l.s16 %v63
  %v70 = vunpack.i.h.s16 %v63
  %v71 = vunpack.i.l.s16 %v64
  %v72 = vunpack.i.h.s16 %v64
  %v73 = vpack.i.b16 %v65, %v65
  %v74 = vpack.i.b16 %v66, %v66
  %v75 = vpack.i.b16 %v67, %v67
  %v76 = vpack.i.b16 %v68, %v68
  %v77 = vpack.i.b16 %v69, %v69
  %v78 = vpack.i.b16 %v70, %v70
  %v79 = vpack.i.b16 %v71, %v71
  %v80 = vpack.i.b16 %v72, %v72
  %v81 = vlaneseq
  %v82 = vshrl.u32 %v81, 7
  %v83 = vsub.s32 0, %v82
  %v84 = vrot.slane %v73, %v83
  %v85 = vlaneseq
  %v86 = vshrl.u32 %v85, 7
  %v87 = vsub.s32 0, %v86
  %v88 = vrot.slane %v74, %v87
  %v89 = vlaneseq
  %v90 = vshrl.u32 %v89, 7
  %v91 = vsub.s32 0, %v90
  %v92 = vrot.slane %v75, %v91
  %v93 = vlaneseq
  %v94 = vshrl.u32 %v93, 7
  %v95 = vsub.s32 0, %v94
  %v96 = vrot.slane %v76, %v95
  %v97 = vlaneseq
  %v98 = vshrl.u32 %v97, 7
  %v99 = vsub.s32 0, %v98
  %v100 = vrot.slane %v77, %v99
  %v101 = vlaneseq
  %v102 = vshrl.u32 %v101, 7
  %v103 = vsub.s32 0, %v102
  %v104 = vrot.slane %v78, %v103
  %v105 = vlaneseq
  %v106 = vshrl.u32 %v105, 7
  %v107 = vsub.s32 0, %v106
  %v108 = vrot.slane %v79, %v107
  %v109 = vlaneseq
  %v110 = vshrl.u32 %v109, 7
  %v111 = vsub.s32 0, %v110
  %v112 = vrot.slane %v80, %v111
  %v114 = vpack.i.b16 %v84, %v84
  %v116 = vlaneseq
  %v117 = vshrl.u32 %v116, 7
  %v118 = vsub.s32 0, %v117
  %v119 = vrot.slane %v114, %v118
  %v121 = vpack.i.b16 %v88, %v88
  %v123 = vlaneseq
  %v124 = vshrl.u32 %v123, 7
  %v125 = vsub.s32 0, %v124
  %v126 = vrot.slane %v121, %v125
  %v128 = vpack.i.b16 %v92, %v92
  %v130 = vlaneseq
  %v131 = vshrl.u32 %v130, 7
  %v132 = vsub.s32 0, %v131
  %v133 = vrot.slane %v128, %v132
  %v135 = vpack.i.b16 %v96, %v96
  %v137 = vlaneseq
  %v138 = vshrl.u32 %v137, 7
  %v139 = vsub.s32 0, %v138
  %v140 = vrot.slane %v135, %v139
  %v142 = vpack.i.b16 %v100, %v100
  %v144 = vlaneseq
  %v145 = vshrl.u32 %v144, 7
  %v146 = vsub.s32 0, %v145
  %v147 = vrot.slane %v142, %v146
  %v149 = vpack.i.b16 %v104, %v104
  %v151 = vlaneseq
  %v152 = vshrl.u32 %v151, 7
  %v153 = vsub.s32 0, %v152
  %v154 = vrot.slane %v149, %v153
  %v156 = vpack.i.b16 %v108, %v108
  %v158 = vlaneseq
  %v159 = vshrl.u32 %v158, 7
  %v160 = vsub.s32 0, %v159
  %v161 = vrot.slane %v156, %v160
  %v163 = vpack.i.b16 %v112, %v112
  %v165 = vlaneseq
  %v166 = vshrl.u32 %v165, 7
  %v167 = vsub.s32 0, %v166
  %v168 = vrot.slane %v163, %v167
  %v169 = vsub.bf16 %v119, %v39
  %v170 = vsub.bf16 %v126, %v39
  %v171 = vsub.bf16 %v133, %v39
  %v172 = vsub.bf16 %v140, %v39
  %v173 = vsub.bf16 %v147, %v39
  %v174 = vsub.bf16 %v154, %v39
  %v175 = vsub.bf16 %v161, %v39
  %v176 = vsub.bf16 %v168, %v39
  %v177 = vand.u32 2147450879, %v169
  %v178 = vand.u32 2147450879, %v170
  %v179 = vand.u32 2147450879, %v171
  %v180 = vand.u32 2147450879, %v172
  %v181 = vand.u32 2147450879, %v173
  %v182 = vand.u32 2147450879, %v174
  %v183 = vand.u32 2147450879, %v175
  %v184 = vand.u32 2147450879, %v176
  %v185 = vld [vmem:[%s2] sm:$0xf]
  %v186 = vld [vmem:[%s2 + $0x4] sm:$0xf]
  %v187 = vld [vmem:[%s2 + $0x8] sm:$0xf]
  %v188 = vld [vmem:[%s2 + $0xc] sm:$0xf]
  %v197 = vunpack.c.l.b16 %v177
  %v198 = vunpack.c.l.b16 %v178
  %v199 = vunpack.c.l.b16 %v179
  %v200 = vunpack.c.l.b16 %v180
  %v201 = vunpack.c.l.b16 %v181
  %v202 = vunpack.c.l.b16 %v182
  %v203 = vunpack.c.l.b16 %v183
  %v204 = vunpack.c.l.b16 %v184
  %v205 = vpack.c.b16 %v198, %v197
  %v206 = vpack.c.b16 %v200, %v199
  %v207 = vpack.c.b16 %v202, %v201
  %v208 = vpack.c.b16 %v204, %v203
  %v213 = vunpack.c.l.b16 %v185
  %v214 = vunpack.c.l.b16 %v186
  %v215 = vunpack.c.l.b16 %v187
  %v216 = vunpack.c.l.b16 %v188
  %v217 = vpack.c.b16 %v214, %v213
  %v218 = vpack.c.b16 %v216, %v215
  %vm221 = vcmask 261120
  %v223 = vsel %vm221, %v205, 0
  %v226 = vsel %vm221, %v206, 0
  %v229 = vsel %vm221, %v207, 0
  %v232 = vsel %vm221, %v208, 0
  %234 = vmatprep.subr.bf16.mxu0 0
  %235 = vmatpush1.bf16.msra.mxu0 0
  %236 = vmatprep.subr.bf16.mxu0 0
  %237 = vmatpush1.bf16.msra.mxu0 0
  %238 = vmatprep.subr.bf16.mxu0 0
  %239 = vmatpush1.bf16.msra.mxu0 0
  %240 = vmatprep.subr.bf16.mxu0 0
  %241 = vmatpush1.bf16.msra.mxu0 0
  %242 = vmatprep.subr.bf16.mxu0 0
  %243 = vmatpush1.bf16.msra.mxu0 0
  %244 = vmatprep.subr.bf16.mxu0 0
  %245 = vmatpush1.bf16.msra.mxu0 0
  %246 = vmatprep.subr.bf16.mxu0 0
  %247 = vmatpush1.bf16.msra.mxu0 %v218
  %248 = vmatprep.subr.bf16.mxu0 0
  %249 = vmatpush1.bf16.msra.mxu0 %v217
  %250 = vmatprep.subr.bf16.mxu0 0
  %251 = vmatpush2.bf16.msra.mxu0 0
  %252 = vmatprep.subr.bf16.mxu0 0
  %253 = vmatpush2.bf16.msra.mxu0 0
  %254 = vmatprep.subr.bf16.mxu0 0
  %255 = vmatpush2.bf16.msra.mxu0 0
  %256 = vmatprep.subr.bf16.mxu0 0
  %257 = vmatpush2.bf16.msra.mxu0 0
  %258 = vmatprep.subr.bf16.mxu0 0
  %259 = vmatpush2.bf16.msra.mxu0 0
  %260 = vmatprep.subr.bf16.mxu0 0
  %261 = vmatpush2.bf16.msra.mxu0 0
  %262 = vmatprep.subr.bf16.mxu0 0
  %263 = vmatpush2.bf16.msra.mxu0 0
  %264 = vmatprep.subr.bf16.mxu0 0
  %265 = vmatpush2.bf16.msra.mxu0 0
  %266 = vmatprep.mubr.bf16.mxu0 0
  %267 = vmatmul.mubr.bf16.gmra.mxu0 %v223
  %v268 = vpop.f32.mrf.mxu0
  %v269 = vadd.f32 0.0, %v268
  %v270 = vpop.f32.mrf.mxu0
  %v271 = vpop.f32.mrf.mxu0
  %v272 = vadd.f32 0.0, %v271
  %v273 = vpop.f32.mrf.mxu0
  %274 = vmatprep.mubr.bf16.mxu0 0
  %275 = vmatmul.mubr.bf16.gmra.mxu0 %v226
  %v276 = vpop.f32.mrf.mxu0
  %v277 = vadd.f32 0.0, %v276
  %v278 = vpop.f32.mrf.mxu0
  %v279 = vpop.f32.mrf.mxu0
  %v280 = vadd.f32 0.0, %v279
  %v281 = vpop.f32.mrf.mxu0
  %282 = vmatprep.mubr.bf16.mxu0 0
  %283 = vmatmul.mubr.bf16.gmra.mxu0 %v229
  %v284 = vpop.f32.mrf.mxu0
  %v285 = vadd.f32 0.0, %v284
  %v286 = vpop.f32.mrf.mxu0
  %v287 = vpop.f32.mrf.mxu0
  %v288 = vadd.f32 0.0, %v287
  %v289 = vpop.f32.mrf.mxu0
  %290 = vmatprep.mubr.bf16.mxu0 0
  %291 = vmatmul.mubr.bf16.gmra.mxu0 %v232
  %v292 = vpop.f32.mrf.mxu0
  %v293 = vadd.f32 0.0, %v292
  %v294 = vpop.f32.mrf.mxu0
  %v295 = vpop.f32.mrf.mxu0
  %v296 = vadd.f32 0.0, %v295
  %v297 = vpop.f32.mrf.mxu0
  %298 = vdwg.mxu0
  %v299 = vld [vmem:[%s3] sm:$0x1]
  %v301 = vlaneseq
  %v302 = vshrl.u32 %v301, 7
  %v303 = vsub.s32 0, %v302
  %v304 = vrot.slane %v299, %v303
  %v306 = vmul.f32 %v269, %v304
  %v307 = vmul.f32 %v272, %v304
  %v308 = vmul.f32 %v277, %v304
  %v309 = vmul.f32 %v280, %v304
  %v310 = vmul.f32 %v285, %v304
  %v311 = vmul.f32 %v288, %v304
  %v312 = vmul.f32 %v293, %v304
  %v313 = vmul.f32 %v296, %v304
  %v314 = vld [vmem:[%s4] sm:$0x1]
  %v316 = vlaneseq
  %v317 = vshrl.u32 %v316, 7
  %v318 = vsub.s32 0, %v317
  %v319 = vrot.slane %v314, %v318
  %v321 = vadd.f32 %v306, %v319
  %v322 = vadd.f32 %v307, %v319
  %v323 = vadd.f32 %v308, %v319
  %v324 = vadd.f32 %v309, %v319
  %v325 = vadd.f32 %v310, %v319
  %v326 = vadd.f32 %v311, %v319
  %v327 = vadd.f32 %v312, %v319
  %v328 = vadd.f32 %v313, %v319
  %v329 = vmul.f32 %v321, 0.01
  %v330 = vmul.f32 %v322, 0.01
  %v331 = vmul.f32 %v323, 0.01
  %v332 = vmul.f32 %v324, 0.01
  %v333 = vmul.f32 %v325, 0.01
  %v334 = vmul.f32 %v326, 0.01
  %v335 = vmul.f32 %v327, 0.01
  %v336 = vmul.f32 %v328, 0.01
  %v337 = vmax.f32 %v321, %v329
  %v338 = vmax.f32 %v322, %v330
  %v339 = vmax.f32 %v323, %v331
  %v340 = vmax.f32 %v324, %v332
  %v341 = vmax.f32 %v325, %v333
  %v342 = vmax.f32 %v326, %v334
  %v343 = vmax.f32 %v327, %v335
  %v344 = vmax.f32 %v328, %v336
  %v345 = vpack.c.bf16 %v338, %v337
  %v346 = vpack.c.bf16 %v340, %v339
  %v347 = vpack.c.bf16 %v342, %v341
  %v348 = vpack.c.bf16 %v344, %v343
  %v349 = vld [vmem:[%s5] sm:$0xf]
  %v350 = vld [vmem:[%s5 + $0x4] sm:$0xf]
  %v351 = vld [vmem:[%s5 + $0x8] sm:$0xf]
  %v352 = vld [vmem:[%s5 + $0xc] sm:$0xf]
  %v353 = vld [vmem:[%s5 + $0x10] sm:$0xf]
  %v354 = vld [vmem:[%s5 + $0x14] sm:$0xf]
  %v355 = vld [vmem:[%s5 + $0x18] sm:$0xf]
  %v356 = vld [vmem:[%s5 + $0x1c] sm:$0xf]
  %v365 = vunpack.c.l.b16 %v349
  %v366 = vunpack.c.l.b16 %v350
  %v367 = vunpack.c.l.b16 %v351
  %v368 = vunpack.c.l.b16 %v352
  %v369 = vunpack.c.l.b16 %v353
  %v370 = vunpack.c.l.b16 %v354
  %v371 = vunpack.c.l.b16 %v355
  %v372 = vunpack.c.l.b16 %v356
  %v373 = vpack.c.b16 %v366, %v365
  %v374 = vpack.c.b16 %v368, %v367
  %v375 = vpack.c.b16 %v370, %v369
  %v376 = vpack.c.b16 %v372, %v371
  %vm381 = vcmask 523264
  %v383 = vsel %vm381, %v345, 0
  %v386 = vsel %vm381, %v346, 0
  %v389 = vsel %vm381, %v347, 0
  %v392 = vsel %vm381, %v348, 0
  %394 = vmatprep.subr.bf16.mxu0 0
  %395 = vmatpush1.bf16.msra.mxu0 0
  %396 = vmatprep.subr.bf16.mxu0 0
  %397 = vmatpush1.bf16.msra.mxu0 0
  %398 = vmatprep.subr.bf16.mxu0 0
  %399 = vmatpush1.bf16.msra.mxu0 0
  %400 = vmatprep.subr.bf16.mxu0 0
  %401 = vmatpush1.bf16.msra.mxu0 0
  %402 = vmatprep.subr.bf16.mxu0 0
  %403 = vmatpush1.bf16.msra.mxu0 %v376
  %404 = vmatprep.subr.bf16.mxu0 0
  %405 = vmatpush1.bf16.msra.mxu0 %v375
  %406 = vmatprep.subr.bf16.mxu0 0
  %407 = vmatpush1.bf16.msra.mxu0 %v374
  %408 = vmatprep.subr.bf16.mxu0 0
  %409 = vmatpush1.bf16.msra.mxu0 %v373
  %410 = vmatprep.subr.bf16.mxu0 0
  %411 = vmatpush2.bf16.msra.mxu0 0
  %412 = vmatprep.subr.bf16.mxu0 0
  %413 = vmatpush2.bf16.msra.mxu0 0
  %414 = vmatprep.subr.bf16.mxu0 0
  %415 = vmatpush2.bf16.msra.mxu0 0
  %416 = vmatprep.subr.bf16.mxu0 0
  %417 = vmatpush2.bf16.msra.mxu0 0
  %418 = vmatprep.subr.bf16.mxu0 0
  %419 = vmatpush2.bf16.msra.mxu0 0
  %420 = vmatprep.subr.bf16.mxu0 0
  %421 = vmatpush2.bf16.msra.mxu0 0
  %422 = vmatprep.subr.bf16.mxu0 0
  %423 = vmatpush2.bf16.msra.mxu0 0
  %424 = vmatprep.subr.bf16.mxu0 0
  %425 = vmatpush2.bf16.msra.mxu0 0
  %426 = vmatprep.mubr.bf16.mxu0 0
  %427 = vmatmul.mubr.bf16.gmra.mxu0 %v383
  %v428 = vpop.f32.mrf.mxu0
  %v429 = vadd.f32 0.0, %v428
  %v430 = vpop.f32.mrf.mxu0
  %v431 = vpop.f32.mrf.mxu0
  %v432 = vadd.f32 0.0, %v431
  %v433 = vpop.f32.mrf.mxu0
  %434 = vmatprep.mubr.bf16.mxu0 0
  %435 = vmatmul.mubr.bf16.gmra.mxu0 %v386
  %v436 = vpop.f32.mrf.mxu0
  %v437 = vadd.f32 0.0, %v436
  %v438 = vpop.f32.mrf.mxu0
  %v439 = vpop.f32.mrf.mxu0
  %v440 = vadd.f32 0.0, %v439
  %v441 = vpop.f32.mrf.mxu0
  %442 = vmatprep.mubr.bf16.mxu0 0
  %443 = vmatmul.mubr.bf16.gmra.mxu0 %v389
  %v444 = vpop.f32.mrf.mxu0
  %v445 = vadd.f32 0.0, %v444
  %v446 = vpop.f32.mrf.mxu0
  %v447 = vpop.f32.mrf.mxu0
  %v448 = vadd.f32 0.0, %v447
  %v449 = vpop.f32.mrf.mxu0
  %450 = vmatprep.mubr.bf16.mxu0 0
  %451 = vmatmul.mubr.bf16.gmra.mxu0 %v392
  %v452 = vpop.f32.mrf.mxu0
  %v453 = vadd.f32 0.0, %v452
  %v454 = vpop.f32.mrf.mxu0
  %v455 = vpop.f32.mrf.mxu0
  %v456 = vadd.f32 0.0, %v455
  %v457 = vpop.f32.mrf.mxu0
  %458 = vdwg.mxu0
  %v459 = vld [vmem:[%s6] sm:$0x1]
  %v461 = vlaneseq
  %v462 = vshrl.u32 %v461, 7
  %v463 = vsub.s32 0, %v462
  %v464 = vrot.slane %v459, %v463
  %v466 = vmul.f32 %v429, %v464
  %v467 = vmul.f32 %v432, %v464
  %v468 = vmul.f32 %v437, %v464
  %v469 = vmul.f32 %v440, %v464
  %v470 = vmul.f32 %v445, %v464
  %v471 = vmul.f32 %v448, %v464
  %v472 = vmul.f32 %v453, %v464
  %v473 = vmul.f32 %v456, %v464
  %v474 = vld [vmem:[%s7] sm:$0x1]
  %v476 = vlaneseq
  %v477 = vshrl.u32 %v476, 7
  %v478 = vsub.s32 0, %v477
  %v479 = vrot.slane %v474, %v478
  %v481 = vadd.f32 %v466, %v479
  %v482 = vadd.f32 %v467, %v479
  %v483 = vadd.f32 %v468, %v479
  %v484 = vadd.f32 %v469, %v479
  %v485 = vadd.f32 %v470, %v479
  %v486 = vadd.f32 %v471, %v479
  %v487 = vadd.f32 %v472, %v479
  %v488 = vadd.f32 %v473, %v479
  %v489 = vmul.f32 %v481, 0.01
  %v490 = vmul.f32 %v482, 0.01
  %v491 = vmul.f32 %v483, 0.01
  %v492 = vmul.f32 %v484, 0.01
  %v493 = vmul.f32 %v485, 0.01
  %v494 = vmul.f32 %v486, 0.01
  %v495 = vmul.f32 %v487, 0.01
  %v496 = vmul.f32 %v488, 0.01
  %v497 = vmax.f32 %v481, %v489
  %v498 = vmax.f32 %v482, %v490
  %v499 = vmax.f32 %v483, %v491
  %v500 = vmax.f32 %v484, %v492
  %v501 = vmax.f32 %v485, %v493
  %v502 = vmax.f32 %v486, %v494
  %v503 = vmax.f32 %v487, %v495
  %v504 = vmax.f32 %v488, %v496
  %v505 = vld [vmem:[%s8] sm:$0x1]
  %v507 = vlaneseq
  %v508 = vshrl.u32 %v507, 7
  %v509 = vsub.s32 0, %v508
  %v510 = vrot.slane %v505, %v509
  %v512 = vmul.f32 %v497, %v510
  %v513 = vmul.f32 %v498, %v510
  %v514 = vmul.f32 %v499, %v510
  %v515 = vmul.f32 %v500, %v510
  %v516 = vmul.f32 %v501, %v510
  %v517 = vmul.f32 %v502, %v510
  %v518 = vmul.f32 %v503, %v510
  %v519 = vmul.f32 %v504, %v510
  %v520 = vsel %vm221, %v512, 0.0
  %521 = vadd.xlane.f32.xlu0 %v520
  %v522 = vpop.xlane.xlu0 %521
  %v523 = vsel %vm221, %v513, 0.0
  %524 = vadd.xlane.f32.xlu0 %v523
  %v525 = vpop.xlane.xlu0 %524
  %v526 = vsel %vm221, %v514, 0.0
  %527 = vadd.xlane.f32.xlu0 %v526
  %v528 = vpop.xlane.xlu0 %527
  %v529 = vsel %vm221, %v515, 0.0
  %530 = vadd.xlane.f32.xlu0 %v529
  %v531 = vpop.xlane.xlu0 %530
  %v532 = vsel %vm221, %v516, 0.0
  %533 = vadd.xlane.f32.xlu0 %v532
  %v534 = vpop.xlane.xlu0 %533
  %v535 = vsel %vm221, %v517, 0.0
  %536 = vadd.xlane.f32.xlu0 %v535
  %v537 = vpop.xlane.xlu0 %536
  %v538 = vsel %vm221, %v518, 0.0
  %539 = vadd.xlane.f32.xlu0 %v538
  %v540 = vpop.xlane.xlu0 %539
  %v541 = vsel %vm221, %v519, 0.0
  %542 = vadd.xlane.f32.xlu0 %v541
  %v543 = vpop.xlane.xlu0 %542
  %v544 = vld [vmem:[#allocation2] sm:$0x1]
  %v546 = vlaneseq
  %v547 = vshrl.u32 %v546, 7
  %v548 = vsub.s32 0, %v547
  %v549 = vrot.slane %v544, %v548
  %550 = vset.pattern.permute.xlu0 0
  %551 = vperm.xlu0 %550, %v549
  %v552 = vpop.permute.xlu0 %551
  %v554 = vadd.f32 %v522, %v552
  %v555 = vadd.f32 %v525, %v552
  %v556 = vadd.f32 %v528, %v552
  %v557 = vadd.f32 %v531, %v552
  %v558 = vadd.f32 %v534, %v552
  %v559 = vadd.f32 %v537, %v552
  %v560 = vadd.f32 %v540, %v552
  %v561 = vadd.f32 %v543, %v552
  %v562 = vxor.u32 %v554, 2147483648
  %v563 = vxor.u32 %v555, 2147483648
  %v564 = vxor.u32 %v556, 2147483648
  %v565 = vxor.u32 %v557, 2147483648
  %v566 = vxor.u32 %v558, 2147483648
  %v567 = vxor.u32 %v559, 2147483648
  %v568 = vxor.u32 %v560, 2147483648
  %v569 = vxor.u32 %v561, 2147483648
  %v570 = vmul.f32 %v562, 1.442695
  %v571 = vpow.pop %v570
  %v572 = vmul.f32 %v563, 1.442695
  %v573 = vpow.pop %v572
  %v574 = vmul.f32 %v564, 1.442695
  %v575 = vpow.pop %v574
  %v576 = vmul.f32 %v565, 1.442695
  %v577 = vpow.pop %v576
  %v578 = vmul.f32 %v566, 1.442695
  %v579 = vpow.pop %v578
  %v580 = vmul.f32 %v567, 1.442695
  %v581 = vpow.pop %v580
  %v582 = vmul.f32 %v568, 1.442695
  %v583 = vpow.pop %v582
  %v584 = vmul.f32 %v569, 1.442695
  %v585 = vpow.pop %v584
  %v586 = vadd.f32 %v571, 1.0
  %v587 = vadd.f32 %v573, 1.0
  %v588 = vadd.f32 %v575, 1.0
  %v589 = vadd.f32 %v577, 1.0
  %v590 = vadd.f32 %v579, 1.0
  %v591 = vadd.f32 %v581, 1.0
  %v592 = vadd.f32 %v583, 1.0
  %v593 = vadd.f32 %v585, 1.0
  %v594 = vrcp.pop %v586
  %v595 = vmul.f32 1.0, %v594
  %v596 = vrcp.pop %v587
  %v597 = vmul.f32 1.0, %v596
  %v598 = vrcp.pop %v588
  %v599 = vmul.f32 1.0, %v598
  %v600 = vrcp.pop %v589
  %v601 = vmul.f32 1.0, %v600
  %v602 = vrcp.pop %v590
  %v603 = vmul.f32 1.0, %v602
  %v604 = vrcp.pop %v591
  %v605 = vmul.f32 1.0, %v604
  %v606 = vrcp.pop %v592
  %v607 = vmul.f32 1.0, %v606
  %v608 = vrcp.pop %v593
  %v609 = vmul.f32 1.0, %v608
  %v618 = vlaneseq
  %v619 = vand.u32 %v618, 127
  %v620 = vlaneseq
  %v621 = vshrl.u32 %v620, 7
  %v622 = vsub.s32 %v619, %v621
  %v623 = vrot.slane %v595, %v622
  %v624 = vlaneseq
  %v625 = vshrl.u32 %v624, 7
  %v626 = vsub.s32 %v619, %v625
  %v627 = vrot.slane %v597, %v626
  %v628 = vlaneseq
  %v629 = vshrl.u32 %v628, 7
  %v630 = vsub.s32 %v619, %v629
  %v631 = vrot.slane %v599, %v630
  %v632 = vlaneseq
  %v633 = vshrl.u32 %v632, 7
  %v634 = vsub.s32 %v619, %v633
  %v635 = vrot.slane %v601, %v634
  %v636 = vlaneseq
  %v637 = vshrl.u32 %v636, 7
  %v638 = vsub.s32 %v619, %v637
  %v639 = vrot.slane %v603, %v638
  %v640 = vlaneseq
  %v641 = vshrl.u32 %v640, 7
  %v642 = vsub.s32 %v619, %v641
  %v643 = vrot.slane %v605, %v642
  %v644 = vlaneseq
  %v645 = vshrl.u32 %v644, 7
  %v646 = vsub.s32 %v619, %v645
  %v647 = vrot.slane %v607, %v646
  %v648 = vlaneseq
  %v649 = vshrl.u32 %v648, 7
  %v650 = vsub.s32 %v619, %v649
  %v651 = vrot.slane %v609, %v650
  %vm652 = vcmask 1041409
  %v653 = vsel %vm652, %v627, %v623
  %vm654 = vcmask 1042434
  %v655 = vsel %vm654, %v631, %v653
  %vm656 = vcmask 1043459
  %v657 = vsel %vm656, %v635, %v655
  %vm658 = vcmask 1044484
  %v659 = vsel %vm658, %v639, %v657
  %vm660 = vcmask 1045509
  %v661 = vsel %vm660, %v643, %v659
  %vm662 = vcmask 1046534
  %v663 = vsel %vm662, %v647, %v661
  %vm664 = vcmask 1047559
  %v665 = vsel %vm664, %v651, %v663
  %vm667 = vcmask 64512
  %668 = vst.msk [vmem:[%s10] sm:$0xff] %vm667, %v665
  // Predicated region
  $region42: #{classifier_gnn_forward.2} parent=0 // pred_check
    _
  $region43: #{classifier_gnn_forward.2} parent=0 // pred_check_branch
    %670 = sbr.rel (0) target = $region45
  $region44: #{classifier_gnn_forward.2} parent=0 // pred_region
    _
  $region45: #{classifier_gnn_forward.2} parent=0 // pred_fallthru
    _
  // Predicated region
  $region46: #{classifier_gnn_forward.2} parent=0 // pred_check
    _
  $region47: #{classifier_gnn_forward.2} parent=0 // pred_check_branch
    %672 = sbr.rel (0) target = $region49
  $region48: #{classifier_gnn_forward.2} parent=0 // pred_region
    _
  $region49: #{classifier_gnn_forward.2} parent=0 // pred_fallthru
    _

</llo_original>
